<compile_context>
chip_gen: v5e
topology: v5e:2x2
jax: 0.10.0
libtpu: 0.0.40
codegen_flags: <defaults>
</compile_context>

<pallas_src>
import functools
import math

import jax
import jax.numpy as jnp
from jax.experimental import pallas as pl
from jax.experimental.pallas import tpu as pltpu


def _round_up(x, m):
    return (x + m - 1) // m * m


def _instance_loss_kernel(zi_rows_ref, zj_rows_ref, zi_cols_ref, zj_cols_ref,
                          out_ref, lhs_ref, m_ref, l_ref, *,
                          inv_temp, batch, block_rows, block_cols):
    r = pl.program_id(0)
    c = pl.program_id(1)
    tm = block_rows
    tn = block_cols
    neg = jnp.float32(-1e30)
    inv_t = jnp.float32(inv_temp)

    @pl.when(c == 0)
    def _init():
        # Scale the small LHS block once per row block (f32 math, single cast)
        # and keep it resident across the column sweep; reset accumulators.
        lhs_ref[pl.ds(0, tm), :] = (
            zi_rows_ref[...].astype(jnp.float32) * inv_t).astype(lhs_ref.dtype)
        lhs_ref[pl.ds(tm, tm), :] = (
            zj_rows_ref[...].astype(jnp.float32) * inv_t).astype(lhs_ref.dtype)
        m_ref[...] = jnp.full_like(m_ref, neg)
        l_ref[...] = jnp.zeros_like(l_ref)

    lhs = lhs_ref[...]                                    # (2*TM, Dp), matmul dtype

    dot = functools.partial(
        jax.lax.dot_general,
        dimension_numbers=(((1,), (1,)), ((), ())),       # contract feature dim
        preferred_element_type=jnp.float32)

    # Two M=2*TM matmuls: fused rows of both halves vs this column block of
    # z_i and of z_j.
    s_a = dot(lhs, zi_cols_ref[...])                      # (2*TM, TN)
    s_b = dot(lhs, zj_cols_ref[...])                      # (2*TM, TN)

    # Masks from tiny iotas only.
    col_ids = jax.lax.broadcasted_iota(jnp.int32, (1, tn), 1) + c * tn
    pad_bias = jnp.where(col_ids >= batch, neg, jnp.float32(0.0))    # (1, TN)
    row_p = jax.lax.broadcasted_iota(jnp.int32, (2 * tm, 1), 0)
    is_top = row_p < tm                                              # z_i-half rows
    row_half = jnp.where(is_top, row_p, row_p - tm) + r * tm         # global in-half id
    same = row_half == col_ids                                        # (2*TM, TN)

    # Self-similarity masked; partner column stays (it is in the CE denominator).
    s_a = jnp.where(same & is_top, neg, s_a + pad_bias)
    s_b = jnp.where(same & jnp.logical_not(is_top), neg, s_b + pad_bias)

    # Online logsumexp over the column sweep (f32, v5e-safe).
    m_prev = m_ref[...]
    m_blk = jnp.maximum(jnp.max(s_a, axis=-1, keepdims=True),
                        jnp.max(s_b, axis=-1, keepdims=True))
    m_new = jnp.maximum(m_prev, m_blk)
    alpha = jnp.exp(m_prev - m_new)
    l_ref[...] = (alpha * l_ref[...]
                  + jnp.sum(jnp.exp(s_a - m_new), axis=-1, keepdims=True)
                  + jnp.sum(jnp.exp(s_b - m_new), axis=-1, keepdims=True))
    m_ref[...] = m_new

    @pl.when(c == pl.num_programs(1) - 1)
    def _finalize():
        lse = m_ref[...] + jnp.log(l_ref[...])            # (2*TM, 1)
        # Positive logit z_i[k].z_j[k] / T, identical for both halves.  Computed
        # from the scaled LHS so it matches the matmul operand on the LHS side.
        pos = jnp.sum(lhs_ref[pl.ds(0, tm), :].astype(jnp.float32)
                      * zj_rows_ref[...].astype(jnp.float32),
                      axis=-1, keepdims=True)             # (TM, 1)
        pos2 = jnp.concatenate([pos, pos], axis=0)        # (2*TM, 1)
        row_valid = row_half < batch                      # padded rows -> 0
        block_sum = jnp.sum(jnp.where(row_valid, lse - pos2, jnp.float32(0.0)))
        # Lane-dense (1, 8, 128) store; wrapper reads element [0, 0] per block.
        out_ref[...] = jnp.broadcast_to(block_sum, (1, 8, 128))


def instance_loss(z_i, z_j, temperature, *, block_rows=128, block_cols=512,
                  matmul_dtype=jnp.bfloat16):
    """Pallas implementation of InstanceLoss.forward(z_i, z_j)."""
    assert z_i.shape == z_j.shape and z_i.ndim == 2
    assert block_rows % 128 == 0 and block_cols % 128 == 0
    batch, hidden = z_i.shape
    n = 2 * batch

    d_pad = _round_up(hidden, 128)                    # lane-dense feature dim
    tm = min(block_rows, _round_up(batch, 128))       # row tile (per half)
    b_pad = _round_up(batch, tm)
    tn = math.gcd(b_pad, max(block_cols, 128))        # column tile, divides b_pad
    num_row_blocks = b_pad // tm
    num_col_blocks = b_pad // tn

    # Cast in the wrapper (no per-step in-kernel RHS cast), then zero-pad.
    zi = z_i.astype(matmul_dtype)
    zj = z_j.astype(matmul_dtype)
    if (b_pad, d_pad) != (batch, hidden):
        pad = ((0, b_pad - batch), (0, d_pad - hidden))
        zi = jnp.pad(zi, pad)
        zj = jnp.pad(zj, pad)

    # VMEM budget: double-buffered row+col blocks of both halves, fused-LHS
    # scratch, generous allowance for live f32 sim/exp tiles, plus headroom.
    itemsize = jnp.dtype(matmul_dtype).itemsize
    in_bytes = 2 * 2 * (tm * d_pad + tn * d_pad) * itemsize
    lhs_bytes = 2 * tm * d_pad * itemsize
    sim_bytes = 8 * (2 * tm) * tn * 4
    out_bytes = 2 * 8 * 128 * 4
    vmem_limit = in_bytes + lhs_bytes + sim_bytes + out_bytes + (4 << 20)
    vmem_limit = int(min(max(vmem_limit, 32 << 20), 56 << 20))   # <= v7x 64 MiB

    kernel = functools.partial(
        _instance_loss_kernel,
        inv_temp=1.0 / float(temperature),
        batch=batch,
        block_rows=tm,
        block_cols=tn)

    partials = pl.pallas_call(
        kernel,
        out_shape=jax.ShapeDtypeStruct((num_row_blocks, 8, 128), jnp.float32),
        grid=(num_row_blocks, num_col_blocks),
        in_specs=[
            pl.BlockSpec((tm, d_pad), lambda r, c: (r, 0)),   # z_i row block
            pl.BlockSpec((tm, d_pad), lambda r, c: (r, 0)),   # z_j row block
            pl.BlockSpec((tn, d_pad), lambda r, c: (c, 0)),   # z_i col block
            pl.BlockSpec((tn, d_pad), lambda r, c: (c, 0)),   # z_j col block
        ],
        out_specs=pl.BlockSpec((1, 8, 128), lambda r, c: (r, 0, 0)),
        scratch_shapes=[
            pltpu.VMEM((2 * tm, d_pad), matmul_dtype),        # fused scaled LHS
            pltpu.VMEM((2 * tm, 1), jnp.float32),             # running max m
            pltpu.VMEM((2 * tm, 1), jnp.float32),             # running sum l
        ],
        compiler_params=pltpu.CompilerParams(
            dimension_semantics=("parallel", "arbitrary"),
            vmem_limit_bytes=vmem_limit),
    )(zi, zj, zi, zj)

    return jnp.sum(partials[:, 0, 0]) / jnp.float32(n)


def _instance_loss_reference(z_i, z_j, temperature):
    """Pure-JAX reference mirroring the PyTorch forward."""
    batch = z_i.shape[0]
    n = 2 * batch
    z = jnp.concatenate([z_i, z_j], axis=0).astype(jnp.float32)
    sim = (z @ z.T) / temperature
    idx = jnp.arange(n)
    pos = sim[idx, (idx + batch) % n]
    sim_no_diag = jnp.where(idx[:, None] == idx[None, :], -jnp.inf, sim)
    lse = jax.scipy.special.logsumexp(sim_no_diag, axis=-1)
    return jnp.sum(lse - pos) / n


if __name__ == "__main__":
    key = jax.random.PRNGKey(0)
    k1, k2 = jax.random.split(key)
    batch, hidden = 8, 32
    temperature = 0.5

    z_i = jax.random.normal(k1, (batch, hidden), dtype=jnp.float32)
    z_j = jax.random.normal(k2, (batch, hidden), dtype=jnp.float32)

    ref = jax.block_until_ready(_instance_loss_reference(z_i, z_j, temperature))

    # Exact path (f32 MXU operands) -- tight tolerance vs the reference.
    # (Test-only on v5e: f32 matmul multi-passes the MXU there.)
    loss_f32 = jax.block_until_ready(
        instance_loss(z_i, z_j, temperature, matmul_dtype=jnp.float32))
    assert jnp.isfinite(loss_f32), "kernel produced non-finite loss (f32 path)"
    assert abs(float(loss_f32) - float(ref)) < 1e-3, (float(loss_f32), float(ref))

    # Fast path (default: bf16 MXU operands, f32 accumulation + f32 epilogue).
    loss_bf16 = jax.block_until_ready(instance_loss(z_i, z_j, temperature))
    assert jnp.isfinite(loss_bf16), "kernel produced non-finite loss (bf16 path)"
    assert abs(float(loss_bf16) - float(ref)) < 2e-2 * abs(float(ref)) + 1e-2, (
        float(loss_bf16), float(ref))

    print("KERNEL_OK")
</pallas_src>

<mosaic_0001>
module attributes {stable_mosaic.version = 11 : i64} {
  func.func @_instance_loss_kernel(%arg0: i32, %arg1: i32, %arg2: memref<128x128xf32, #tpu.memory_space<vmem>>, %arg3: memref<128x128xf32, #tpu.memory_space<vmem>>, %arg4: memref<128x128xf32, #tpu.memory_space<vmem>>, %arg5: memref<128x128xf32, #tpu.memory_space<vmem>>, %arg6: memref<1x8x128xf32, #tpu.memory_space<vmem>>, %arg7: memref<256x128xf32, #tpu.memory_space<vmem>>, %arg8: memref<256x1xf32, #tpu.memory_space<vmem>>, %arg9: memref<256x1xf32, #tpu.memory_space<vmem>>) attributes {dimension_semantics = [#tpu.dimension_semantics<parallel>, #tpu.dimension_semantics<arbitrary>], iteration_bounds = array<i64: 1, 1>, scalar_prefetch = 0 : i64, scratch_operands = 3 : i64, tpu.core_type = #tpu.core_type<tc>, window_params = [{transform_indices = @transform_0, window_bounds = array<i64: 128, 128>}, {transform_indices = @transform_1, window_bounds = array<i64: 128, 128>}, {transform_indices = @transform_2, window_bounds = array<i64: 128, 128>}, {transform_indices = @transform_3, window_bounds = array<i64: 128, 128>}, {transform_indices = @transform_4, window_bounds = array<i64: 1, 8, 128>}]} {
    %c0_i32 = arith.constant 0 : i32
    %0 = arith.cmpi eq, %arg1, %c0_i32 : i32
    %1 = arith.extui %0 : i1 to i32
    %cst = arith.constant 2.000000e+00 : f32
    %cst_0 = arith.constant -1.000000e+30 : f32
    %c0_i32_1 = arith.constant 0 : i32
    %2 = arith.cmpi ne, %1, %c0_i32_1 : i32
    scf.if %2 {
      %c0_31 = arith.constant 0 : index
      %c0_32 = arith.constant 0 : index
      %70 = vector.load %arg2[%c0_31, %c0_32] : memref<128x128xf32, #tpu.memory_space<vmem>>, vector<128x128xf32>
      %71 = vector.broadcast %cst : f32 to vector<128x128xf32>
      %72 = arith.mulf %70, %71 : vector<128x128xf32>
      %c0_33 = arith.constant 0 : index
      %c0_34 = arith.constant 0 : index
      %73 = vector.load %arg7[%c0_33, %c0_34] : memref<256x128xf32, #tpu.memory_space<vmem>>, vector<128x128xf32>
      tpu.vector_store %arg7[%c0_33, %c0_34], %72 {strides = array<i32>} : memref<256x128xf32, #tpu.memory_space<vmem>>, vector<128x128xf32>,
      %c0_35 = arith.constant 0 : index
      %c0_36 = arith.constant 0 : index
      %74 = vector.load %arg3[%c0_35, %c0_36] : memref<128x128xf32, #tpu.memory_space<vmem>>, vector<128x128xf32>
      %75 = vector.broadcast %cst : f32 to vector<128x128xf32>
      %76 = arith.mulf %74, %75 : vector<128x128xf32>
      %c128 = arith.constant 128 : index
      %c0_37 = arith.constant 0 : index
      %77 = vector.load %arg7[%c128, %c0_37] : memref<256x128xf32, #tpu.memory_space<vmem>>, vector<128x128xf32>
      tpu.vector_store %arg7[%c128, %c0_37], %76 {strides = array<i32>} : memref<256x128xf32, #tpu.memory_space<vmem>>, vector<128x128xf32>,
      %78 = vector.broadcast %cst_0 : f32 to vector<256x1xf32>
      %c0_38 = arith.constant 0 : index
      %c0_39 = arith.constant 0 : index
      %79 = vector.load %arg8[%c0_38, %c0_39] : memref<256x1xf32, #tpu.memory_space<vmem>>, vector<256x1xf32>
      tpu.vector_store %arg8[%c0_38, %c0_39], %78 {strides = array<i32>} : memref<256x1xf32, #tpu.memory_space<vmem>>, vector<256x1xf32>,
      %cst_40 = arith.constant 0.000000e+00 : f32
      %80 = vector.broadcast %cst_40 : f32 to vector<256x1xf32>
      %c0_41 = arith.constant 0 : index
      %c0_42 = arith.constant 0 : index
      %81 = vector.load %arg9[%c0_41, %c0_42] : memref<256x1xf32, #tpu.memory_space<vmem>>, vector<256x1xf32>
      tpu.vector_store %arg9[%c0_41, %c0_42], %80 {strides = array<i32>} : memref<256x1xf32, #tpu.memory_space<vmem>>, vector<256x1xf32>,
    } else {
    }
    %c0 = arith.constant 0 : index
    %c0_2 = arith.constant 0 : index
    %3 = vector.load %arg7[%c0, %c0_2] : memref<256x128xf32, #tpu.memory_space<vmem>>, vector<256x128xf32>
    %c0_3 = arith.constant 0 : index
    %c0_4 = arith.constant 0 : index
    %4 = vector.load %arg4[%c0_3, %c0_4] : memref<128x128xf32, #tpu.memory_space<vmem>>, vector<128x128xf32>
    %cst_5 = arith.constant dense<0.000000e+00> : vector<256x128xf32>
    %5 = tpu.matmul %3, %4, %cst_5 {dimension_numbers = #tpu.dot_dimension_numbers<[1], [1], [0], [0], [0, 0, 1, 0], [], []>} : vector<256x128xf32>, vector<128x128xf32>, vector<256x128xf32> -> vector<256x128xf32>
    %c0_6 = arith.constant 0 : index
    %c0_7 = arith.constant 0 : index
    %6 = vector.load %arg5[%c0_6, %c0_7] : memref<128x128xf32, #tpu.memory_space<vmem>>, vector<128x128xf32>
    %cst_8 = arith.constant dense<0.000000e+00> : vector<256x128xf32>
    %7 = tpu.matmul %3, %6, %cst_8 {dimension_numbers = #tpu.dot_dimension_numbers<[1], [1], [0], [0], [0, 0, 1, 0], [], []>} : vector<256x128xf32>, vector<128x128xf32>, vector<256x128xf32> -> vector<256x128xf32>
    %8 = tpu.iota {dimensions = array<i32: 1>} : vector<1x128xi32>
    %c128_i32 = arith.constant 128 : i32
    %9 = arith.muli %arg1, %c128_i32 : i32
    %10 = vector.broadcast %9 : i32 to vector<1x128xi32>
    %11 = arith.addi %8, %10 : vector<1x128xi32>
    %c8_i32 = arith.constant 8 : i32
    %12 = vector.broadcast %c8_i32 : i32 to vector<1x128xi32>
    %13 = arith.cmpi sge, %11, %12 : vector<1x128xi32>
    %cst_9 = arith.constant -1.000000e+30 : f32
    %cst_10 = arith.constant 0.000000e+00 : f32
    %14 = vector.broadcast %cst_9 : f32 to vector<1x128xf32>
    %15 = vector.broadcast %cst_10 : f32 to vector<1x128xf32>
    %16 = arith.select %13, %14, %15 : vector<1x128xi1>, vector<1x128xf32>
    %17 = tpu.iota {dimensions = array<i32: 0>} : vector<256x1xi32>
    %c128_i32_11 = arith.constant 128 : i32
    %18 = vector.broadcast %c128_i32_11 : i32 to vector<256x1xi32>
    %19 = arith.cmpi slt, %17, %18 : vector<256x1xi32>
    %c128_i32_12 = arith.constant 128 : i32
    %20 = vector.broadcast %c128_i32_12 : i32 to vector<256x1xi32>
    %21 = arith.subi %17, %20 : vector<256x1xi32>
    %22 = arith.select %19, %17, %21 : vector<256x1xi1>, vector<256x1xi32>
    %c128_i32_13 = arith.constant 128 : i32
    %23 = arith.muli %arg0, %c128_i32_13 : i32
    %24 = vector.broadcast %23 : i32 to vector<256x1xi32>
    %25 = arith.addi %22, %24 : vector<256x1xi32>
    %26 = vector.broadcast %25 : vector<256x1xi32> to vector<256x128xi32>
    %27 = vector.broadcast %11 : vector<1x128xi32> to vector<256x128xi32>
    %28 = arith.cmpi eq, %26, %27 : vector<256x128xi32>
    %29 = vector.broadcast %19 : vector<256x1xi1> to vector<256x128xi1>
    %30 = arith.andi %28, %29 : vector<256x128xi1>
    %31 = vector.broadcast %16 : vector<1x128xf32> to vector<256x128xf32>
    %32 = arith.addf %5, %31 : vector<256x128xf32>
    %cst_14 = arith.constant -1.000000e+30 : f32
    %33 = vector.broadcast %cst_14 : f32 to vector<256x128xf32>
    %34 = arith.select %30, %33, %32 : vector<256x128xi1>, vector<256x128xf32>
    %cst_15 = arith.constant dense<true> : vector<256x1xi1>
    %35 = arith.xori %19, %cst_15 : vector<256x1xi1>
    %36 = vector.broadcast %35 : vector<256x1xi1> to vector<256x128xi1>
    %37 = arith.andi %28, %36 : vector<256x128xi1>
    %38 = vector.broadcast %16 : vector<1x128xf32> to vector<256x128xf32>
    %39 = arith.addf %7, %38 : vector<256x128xf32>
    %cst_16 = arith.constant -1.000000e+30 : f32
    %40 = vector.broadcast %cst_16 : f32 to vector<256x128xf32>
    %41 = arith.select %37, %40, %39 : vector<256x128xi1>, vector<256x128xf32>
    %c0_17 = arith.constant 0 : index
    %c0_18 = arith.constant 0 : index
    %42 = vector.load %arg8[%c0_17, %c0_18] : memref<256x1xf32, #tpu.memory_space<vmem>>, vector<256x1xf32>
    %cst_19 = arith.constant dense<0xFF800000> : vector<256xf32>
    %43 = vector.multi_reduction <maximumf>, %34, %cst_19 [1] : vector<256x128xf32> to vector<256xf32>
    %44 = vector.shape_cast %43 : vector<256xf32> to vector<256x1xf32>
    %cst_20 = arith.constant dense<0xFF800000> : vector<256xf32>
    %45 = vector.multi_reduction <maximumf>, %41, %cst_20 [1] : vector<256x128xf32> to vector<256xf32>
    %46 = vector.shape_cast %45 : vector<256xf32> to vector<256x1xf32>
    %47 = arith.maximumf %44, %46 : vector<256x1xf32>
    %48 = arith.maximumf %42, %47 : vector<256x1xf32>
    %49 = arith.subf %42, %48 : vector<256x1xf32>
    %50 = math.exp %49 : vector<256x1xf32>
    %c0_21 = arith.constant 0 : index
    %c0_22 = arith.constant 0 : index
    %51 = vector.load %arg9[%c0_21, %c0_22] : memref<256x1xf32, #tpu.memory_space<vmem>>, vector<256x1xf32>
    %52 = arith.mulf %50, %51 : vector<256x1xf32>
    %53 = vector.broadcast %48 : vector<256x1xf32> to vector<256x128xf32>
    %54 = arith.subf %34, %53 : vector<256x128xf32>
    %55 = math.exp %54 : vector<256x128xf32>
    %cst_23 = arith.constant dense<0.000000e+00> : vector<256xf32>
    %56 = vector.multi_reduction <add>, %55, %cst_23 [1] : vector<256x128xf32> to vector<256xf32>
    %57 = vector.shape_cast %56 : vector<256xf32> to vector<256x1xf32>
    %58 = arith.addf %52, %57 : vector<256x1xf32>
    %59 = vector.broadcast %48 : vector<256x1xf32> to vector<256x128xf32>
    %60 = arith.subf %41, %59 : vector<256x128xf32>
    %61 = math.exp %60 : vector<256x128xf32>
    %cst_24 = arith.constant dense<0.000000e+00> : vector<256xf32>
    %62 = vector.multi_reduction <add>, %61, %cst_24 [1] : vector<256x128xf32> to vector<256xf32>
    %63 = vector.shape_cast %62 : vector<256xf32> to vector<256x1xf32>
    %64 = arith.addf %58, %63 : vector<256x1xf32>
    %c0_25 = arith.constant 0 : index
    %c0_26 = arith.constant 0 : index
    %65 = vector.load %arg9[%c0_25, %c0_26] : memref<256x1xf32, #tpu.memory_space<vmem>>, vector<256x1xf32>
    tpu.vector_store %arg9[%c0_25, %c0_26], %64 {strides = array<i32>} : memref<256x1xf32, #tpu.memory_space<vmem>>, vector<256x1xf32>,
    %c0_27 = arith.constant 0 : index
    %c0_28 = arith.constant 0 : index
    %66 = vector.load %arg8[%c0_27, %c0_28] : memref<256x1xf32, #tpu.memory_space<vmem>>, vector<256x1xf32>
    tpu.vector_store %arg8[%c0_27, %c0_28], %48 {strides = array<i32>} : memref<256x1xf32, #tpu.memory_space<vmem>>, vector<256x1xf32>,
    %c0_i32_29 = arith.constant 0 : i32
    %67 = arith.cmpi eq, %arg1, %c0_i32_29 : i32
    %68 = arith.extui %67 : i1 to i32
    %c0_i32_30 = arith.constant 0 : i32
    %69 = arith.cmpi ne, %68, %c0_i32_30 : i32
    scf.if %69 {
      %c0_31 = arith.constant 0 : index
      %c0_32 = arith.constant 0 : index
      %70 = vector.load %arg8[%c0_31, %c0_32] : memref<256x1xf32, #tpu.memory_space<vmem>>, vector<256x1xf32>
      %c0_33 = arith.constant 0 : index
      %c0_34 = arith.constant 0 : index
      %71 = vector.load %arg9[%c0_33, %c0_34] : memref<256x1xf32, #tpu.memory_space<vmem>>, vector<256x1xf32>
      %72 = math.log %71 : vector<256x1xf32>
      %73 = arith.addf %70, %72 : vector<256x1xf32>
      %c0_35 = arith.constant 0 : index
      %c0_36 = arith.constant 0 : index
      %74 = vector.load %arg7[%c0_35, %c0_36] : memref<256x128xf32, #tpu.memory_space<vmem>>, vector<128x128xf32>
      %c0_37 = arith.constant 0 : index
      %c0_38 = arith.constant 0 : index
      %75 = vector.load %arg3[%c0_37, %c0_38] : memref<128x128xf32, #tpu.memory_space<vmem>>, vector<128x128xf32>
      %76 = arith.mulf %74, %75 : vector<128x128xf32>
      %cst_39 = arith.constant dense<0.000000e+00> : vector<128xf32>
      %77 = vector.multi_reduction <add>, %76, %cst_39 [1] : vector<128x128xf32> to vector<128xf32>
      %78 = vector.shape_cast %77 : vector<128xf32> to vector<128x1xf32>
      %79 = tpu.concatenate %78, %78 in 0 : vector<128x1xf32>, vector<128x1xf32> -> vector<256x1xf32>
      %c8_i32_40 = arith.constant 8 : i32
      %80 = vector.broadcast %c8_i32_40 : i32 to vector<256x1xi32>
      %81 = arith.cmpi slt, %25, %80 : vector<256x1xi32>
      %82 = arith.subf %73, %79 : vector<256x1xf32>
      %cst_41 = arith.constant 0.000000e+00 : f32
      %83 = vector.broadcast %cst_41 : f32 to vector<256x1xf32>
      %84 = arith.select %81, %82, %83 : vector<256x1xi1>, vector<256x1xf32>
      %85 = vector.shape_cast %84 : vector<256x1xf32> to vector<1x256x1xf32>
      %cst_42 = arith.constant dense<0.000000e+00> : vector<1xf32>
      %86 = vector.multi_reduction <add>, %85, %cst_42 [1, 2] : vector<1x256x1xf32> to vector<1xf32>
      %87 = vector.shape_cast %86 : vector<1xf32> to vector<1x1x1xf32>
      %88 = vector.extract %87[0, 0, 0] : f32 from vector<1x1x1xf32>
      %89 = vector.broadcast %88 : f32 to vector<1x8x128xf32>
      %c0_43 = arith.constant 0 : index
      %c0_44 = arith.constant 0 : index
      %c0_45 = arith.constant 0 : index
      %90 = vector.load %arg6[%c0_43, %c0_44, %c0_45] : memref<1x8x128xf32, #tpu.memory_space<vmem>>, vector<1x8x128xf32>
      tpu.vector_store %arg6[%c0_43, %c0_44, %c0_45], %89 {strides = array<i32>} : memref<1x8x128xf32, #tpu.memory_space<vmem>>, vector<1x8x128xf32>,
    } else {
    }
    return
  }
  func.func @transform_0(%arg0: i32, %arg1: i32) -> (i32, i32) {
    %c0_i32 = arith.constant 0 : i32
    %c0_i32_0 = arith.constant 0 : i32
    return %arg0, %c0_i32 : i32, i32
  }
  func.func @transform_1(%arg0: i32, %arg1: i32) -> (i32, i32) {
    %c0_i32 = arith.constant 0 : i32
    %c0_i32_0 = arith.constant 0 : i32
    return %arg0, %c0_i32 : i32, i32
  }
  func.func @transform_2(%arg0: i32, %arg1: i32) -> (i32, i32) {
    %c0_i32 = arith.constant 0 : i32
    %c0_i32_0 = arith.constant 0 : i32
    return %arg1, %c0_i32 : i32, i32
  }
  func.func @transform_3(%arg0: i32, %arg1: i32) -> (i32, i32) {
    %c0_i32 = arith.constant 0 : i32
    %c0_i32_0 = arith.constant 0 : i32
    return %arg1, %c0_i32 : i32, i32
  }
  func.func @transform_4(%arg0: i32, %arg1: i32) -> (i32, i32, i32) {
    %c0_i32 = arith.constant 0 : i32
    %c0_i32_0 = arith.constant 0 : i32
    %c0_i32_1 = arith.constant 0 : i32
    return %arg0, %c0_i32, %c0_i32_0 : i32, i32, i32
  }
}

</mosaic_0001>

<llo_original>
// kernel: tpu_custom_call.1
$region0: #{tpu_custom_call.1}
  #allocation0 [shape = 'u32[]', space=smem, size = 0x4, offset = 0x4, fixed_abs, tag = 'smem constant byte address 0x4 - core index']
  #allocation1 [shape = 'u32[72,128]{1,0:T(1,128)}', space=vmem, size = 0x9000, scoped, tag = 'internal scratch']
  #allocation2 [shape = 'f32[256,128]{1,0:T(8,128)}', space=vmem, size = 0x20000, scoped, tag = 'scratch operand']
  #allocation3 [shape = 'f32[256,1]{1,0:T(8,128)}', space=vmem, size = 0x20000, scoped, tag = 'scratch operand']
  #allocation4 [shape = 'f32[256,1]{1,0:T(8,128)}', space=vmem, size = 0x20000, scoped, tag = 'scratch operand']
  %s0 = inlined_call_operand.hbm [shape: f32[128,128], index: 0, kind: input, shape index: {}]
  %s1 = inlined_call_operand.hbm [shape: f32[128,128], index: 1, kind: input, shape index: {}]
  %s2 = inlined_call_operand.hbm [shape: f32[128,128], index: 2, kind: input, shape index: {}]
  %s3 = inlined_call_operand.hbm [shape: f32[128,128], index: 3, kind: input, shape index: {}]
  %s4 = inlined_call_operand.hbm [shape: f32[1,8,128], index: 4, kind: output, shape index: {}]
  %s5 = sld [smem:[#allocation0]]
  $region50: #{tpu_custom_call.1} parent=0
    _
  %s7 = ssub.s32 1, %s5
  %s8 = scalar_select 0, %s7, %s5
  $region1: #{tpu_custom_call.1} parent=0
    #allocation5 [shape = 'u8[65536]{0}', space=vmem, size = 0x10000, scoped, tag = 'input window, operand 0, single buffered']
    #allocation6 [shape = 's32[1]{0}', space=sflag, size = 0x4, scoped, tag = 'scoped memory for tpu_custom_call.1']
    #allocation7 [shape = 's32[1]{0}', space=sflag, size = 0x4, scoped, tag = 'scoped memory for tpu_custom_call.1']
    #allocation8 [shape = 'u8[65536]{0}', space=vmem, size = 0x10000, scoped, tag = 'input window, operand 1, single buffered']
    #allocation9 [shape = 's32[1]{0}', space=sflag, size = 0x4, scoped, tag = 'scoped memory for tpu_custom_call.1']
    #allocation10 [shape = 'u8[65536]{0}', space=vmem, size = 0x10000, scoped, tag = 'input window, operand 2, single buffered']
    #allocation11 [shape = 'u8[65536]{0}', space=vmem, size = 0x10000, scoped, tag = 'input window, operand 3, single buffered']
    #allocation12 [shape = 's32[1]{0}', space=sflag, size = 0x4, scoped, tag = 'scoped memory for tpu_custom_call.1']
    #allocation13 [shape = 'u8[4096]{0}', space=vmem, size = 0x1000, scoped, tag = 'output window, operand 0, single buffered']
    %9 = vsyncpa [#allocation6], 0
    %10 = vsyncpa [#allocation9], 0
    %11 = vsyncpa [#allocation12], 0
    %12 = vsyncpa [#allocation7], 0
    // Predicated region
    $region2: #{tpu_custom_call.1} parent=1 // pred_check
      _
    $region3: #{tpu_custom_call.1} parent=1 // pred_check_branch
      %14 = sbr.rel (0) target = $region5
    $region4: #{tpu_custom_call.1} parent=1 // pred_region
      %16 = vsyncadd [#allocation6], 0
      %s17 = sshll.u32 %s0, 4
      %s18 = int_to_ptr.hbm [resolvable:$true] %s17
      %s19 = sshll.u32 [#allocation5], 4
      %s20 = int_to_ptr.vmem [resolvable:$true] %s19
      %25 = dma.hbm_to_vmem [thread:$0]  %s18, 2048, %s20, [#allocation6], 128, 128, 8
    $region5: #{tpu_custom_call.1} parent=1 // pred_fallthru
      _
    // Predicated region
    $region6: #{tpu_custom_call.1} parent=1 // pred_check
      _
    $region7: #{tpu_custom_call.1} parent=1 // pred_check_branch
      %27 = sbr.rel (0) target = $region9
    $region8: #{tpu_custom_call.1} parent=1 // pred_region
      %29 = vsyncadd [#allocation9], 0
      %s30 = sshll.u32 %s1, 4
      %s31 = int_to_ptr.hbm [resolvable:$true] %s30
      %s32 = sshll.u32 [#allocation8], 4
      %s33 = int_to_ptr.vmem [resolvable:$true] %s32
      %38 = dma.hbm_to_vmem [thread:$0]  %s31, 2048, %s33, [#allocation9], 128, 128, 8
    $region9: #{tpu_custom_call.1} parent=1 // pred_fallthru
      _
    // Predicated region
    $region10: #{tpu_custom_call.1} parent=1 // pred_check
      _
    $region11: #{tpu_custom_call.1} parent=1 // pred_check_branch
      %40 = sbr.rel (0) target = $region13
    $region12: #{tpu_custom_call.1} parent=1 // pred_region
      %42 = vsyncadd [#allocation9], 0
      %s43 = sshll.u32 %s2, 4
      %s44 = int_to_ptr.hbm [resolvable:$true] %s43
      %s45 = sshll.u32 [#allocation10], 4
      %s46 = int_to_ptr.vmem [resolvable:$true] %s45
      %51 = dma.hbm_to_vmem [thread:$0]  %s44, 2048, %s46, [#allocation9], 128, 128, 8
    $region13: #{tpu_custom_call.1} parent=1 // pred_fallthru
      _
    // Predicated region
    $region14: #{tpu_custom_call.1} parent=1 // pred_check
      _
    $region15: #{tpu_custom_call.1} parent=1 // pred_check_branch
      %53 = sbr.rel (0) target = $region17
    $region16: #{tpu_custom_call.1} parent=1 // pred_region
      %55 = vsyncadd [#allocation12], 0
      %s56 = sshll.u32 %s3, 4
      %s57 = int_to_ptr.hbm [resolvable:$true] %s56
      %s58 = sshll.u32 [#allocation11], 4
      %s59 = int_to_ptr.vmem [resolvable:$true] %s58
      %64 = dma.hbm_to_vmem [thread:$0]  %s57, 2048, %s59, [#allocation12], 128, 128, 8
    $region17: #{tpu_custom_call.1} parent=1 // pred_fallthru
      _
    // Predicated region
    $region18: #{tpu_custom_call.1} parent=1 // pred_check
      _
    $region19: #{tpu_custom_call.1} parent=1 // pred_check_branch
      %66 = sbr.rel (0) target = $region21
    $region20: #{tpu_custom_call.1} parent=1 // pred_region
      %68 = dma.done [#allocation6], 2048
    $region21: #{tpu_custom_call.1} parent=1 // pred_fallthru
      _
    // Predicated region
    $region22: #{tpu_custom_call.1} parent=1 // pred_check
      _
    $region23: #{tpu_custom_call.1} parent=1 // pred_check_branch
      %70 = sbr.rel (0) target = $region25
    $region24: #{tpu_custom_call.1} parent=1 // pred_region
      %72 = dma.done [#allocation9], 2048
    $region25: #{tpu_custom_call.1} parent=1 // pred_fallthru
      _
    // Predicated region
    $region26: #{tpu_custom_call.1} parent=1 // pred_check
      _
    $region27: #{tpu_custom_call.1} parent=1 // pred_check_branch
      %74 = sbr.rel (0) target = $region29
    $region28: #{tpu_custom_call.1} parent=1 // pred_region
      %76 = dma.done [#allocation9], 2048
    $region29: #{tpu_custom_call.1} parent=1 // pred_fallthru
      _
    // Predicated region
    $region30: #{tpu_custom_call.1} parent=1 // pred_check
      _
    $region31: #{tpu_custom_call.1} parent=1 // pred_check_branch
      %78 = sbr.rel (0) target = $region33
    $region32: #{tpu_custom_call.1} parent=1 // pred_region
      %80 = dma.done [#allocation12], 2048
    $region33: #{tpu_custom_call.1} parent=1 // pred_fallthru
      _
    %p81 = scmp.eq.s32.totalorder 0, 0
    // Predicated region
    $region34: #{tpu_custom_call.1} parent=1 // pred_check
      %p82 = pneg %p81
    $region35: #{tpu_custom_call.1} parent=1 // pred_check_branch
      %84 = sbr.rel (%p82) target = $region37
    $region36: #{tpu_custom_call.1} parent=1 // pred_region
      %v85 = vld [vmem:[#allocation5] sm:$0xff]
      %v86 = vld [vmem:[#allocation5 + $0x8] sm:$0xff]
      %v87 = vld [vmem:[#allocation5 + $0x10] sm:$0xff]
      %v88 = vld [vmem:[#allocation5 + $0x18] sm:$0xff]
      %v89 = vld [vmem:[#allocation5 + $0x20] sm:$0xff]
      %v90 = vld [vmem:[#allocation5 + $0x28] sm:$0xff]
      %v91 = vld [vmem:[#allocation5 + $0x30] sm:$0xff]
      %v92 = vld [vmem:[#allocation5 + $0x38] sm:$0xff]
      %v93 = vld [vmem:[#allocation5 + $0x40] sm:$0xff]
      %v94 = vld [vmem:[#allocation5 + $0x48] sm:$0xff]
      %v95 = vld [vmem:[#allocation5 + $0x50] sm:$0xff]
      %v96 = vld [vmem:[#allocation5 + $0x58] sm:$0xff]
      %v97 = vld [vmem:[#allocation5 + $0x60] sm:$0xff]
      %v98 = vld [vmem:[#allocation5 + $0x68] sm:$0xff]
      %v99 = vld [vmem:[#allocation5 + $0x70] sm:$0xff]
      %v100 = vld [vmem:[#allocation5 + $0x78] sm:$0xff]
      %v101 = vmul.f32 %v85, 2.0
      %v102 = vmul.f32 %v86, 2.0
      %v103 = vmul.f32 %v87, 2.0
      %v104 = vmul.f32 %v88, 2.0
      %v105 = vmul.f32 %v89, 2.0
      %v106 = vmul.f32 %v90, 2.0
      %v107 = vmul.f32 %v91, 2.0
      %v108 = vmul.f32 %v92, 2.0
      %v109 = vmul.f32 %v93, 2.0
      %v110 = vmul.f32 %v94, 2.0
      %v111 = vmul.f32 %v95, 2.0
      %v112 = vmul.f32 %v96, 2.0
      %v113 = vmul.f32 %v97, 2.0
      %v114 = vmul.f32 %v98, 2.0
      %v115 = vmul.f32 %v99, 2.0
      %v116 = vmul.f32 %v100, 2.0
      %117 = vst [vmem:[#allocation2] sm:$0xff] %v101
      %118 = vst [vmem:[#allocation2 + $0x8] sm:$0xff] %v102
      %119 = vst [vmem:[#allocation2 + $0x10] sm:$0xff] %v103
      %120 = vst [vmem:[#allocation2 + $0x18] sm:$0xff] %v104
      %121 = vst [vmem:[#allocation2 + $0x20] sm:$0xff] %v105
      %122 = vst [vmem:[#allocation2 + $0x28] sm:$0xff] %v106
      %123 = vst [vmem:[#allocation2 + $0x30] sm:$0xff] %v107
      %124 = vst [vmem:[#allocation2 + $0x38] sm:$0xff] %v108
      %125 = vst [vmem:[#allocation2 + $0x40] sm:$0xff] %v109
      %126 = vst [vmem:[#allocation2 + $0x48] sm:$0xff] %v110
      %127 = vst [vmem:[#allocation2 + $0x50] sm:$0xff] %v111
      %128 = vst [vmem:[#allocation2 + $0x58] sm:$0xff] %v112
      %129 = vst [vmem:[#allocation2 + $0x60] sm:$0xff] %v113
      %130 = vst [vmem:[#allocation2 + $0x68] sm:$0xff] %v114
      %131 = vst [vmem:[#allocation2 + $0x70] sm:$0xff] %v115
      %132 = vst [vmem:[#allocation2 + $0x78] sm:$0xff] %v116
      %v133 = vld [vmem:[#allocation8] sm:$0xff]
      %v134 = vld [vmem:[#allocation8 + $0x8] sm:$0xff]
      %v135 = vld [vmem:[#allocation8 + $0x10] sm:$0xff]
      %v136 = vld [vmem:[#allocation8 + $0x18] sm:$0xff]
      %v137 = vld [vmem:[#allocation8 + $0x20] sm:$0xff]
      %v138 = vld [vmem:[#allocation8 + $0x28] sm:$0xff]
      %v139 = vld [vmem:[#allocation8 + $0x30] sm:$0xff]
      %v140 = vld [vmem:[#allocation8 + $0x38] sm:$0xff]
      %v141 = vld [vmem:[#allocation8 + $0x40] sm:$0xff]
      %v142 = vld [vmem:[#allocation8 + $0x48] sm:$0xff]
      %v143 = vld [vmem:[#allocation8 + $0x50] sm:$0xff]
      %v144 = vld [vmem:[#allocation8 + $0x58] sm:$0xff]
      %v145 = vld [vmem:[#allocation8 + $0x60] sm:$0xff]
      %v146 = vld [vmem:[#allocation8 + $0x68] sm:$0xff]
      %v147 = vld [vmem:[#allocation8 + $0x70] sm:$0xff]
      %v148 = vld [vmem:[#allocation8 + $0x78] sm:$0xff]
      %v149 = vmul.f32 %v133, 2.0
      %v150 = vmul.f32 %v134, 2.0
      %v151 = vmul.f32 %v135, 2.0
      %v152 = vmul.f32 %v136, 2.0
      %v153 = vmul.f32 %v137, 2.0
      %v154 = vmul.f32 %v138, 2.0
      %v155 = vmul.f32 %v139, 2.0
      %v156 = vmul.f32 %v140, 2.0
      %v157 = vmul.f32 %v141, 2.0
      %v158 = vmul.f32 %v142, 2.0
      %v159 = vmul.f32 %v143, 2.0
      %v160 = vmul.f32 %v144, 2.0
      %v161 = vmul.f32 %v145, 2.0
      %v162 = vmul.f32 %v146, 2.0
      %v163 = vmul.f32 %v147, 2.0
      %v164 = vmul.f32 %v148, 2.0
      %165 = vst [vmem:[#allocation2 + $0x80] sm:$0xff] %v149
      %166 = vst [vmem:[#allocation2 + $0x88] sm:$0xff] %v150
      %167 = vst [vmem:[#allocation2 + $0x90] sm:$0xff] %v151
      %168 = vst [vmem:[#allocation2 + $0x98] sm:$0xff] %v152
      %169 = vst [vmem:[#allocation2 + $0xa0] sm:$0xff] %v153
      %170 = vst [vmem:[#allocation2 + $0xa8] sm:$0xff] %v154
      %171 = vst [vmem:[#allocation2 + $0xb0] sm:$0xff] %v155
      %172 = vst [vmem:[#allocation2 + $0xb8] sm:$0xff] %v156
      %173 = vst [vmem:[#allocation2 + $0xc0] sm:$0xff] %v157
      %174 = vst [vmem:[#allocation2 + $0xc8] sm:$0xff] %v158
      %175 = vst [vmem:[#allocation2 + $0xd0] sm:$0xff] %v159
      %176 = vst [vmem:[#allocation2 + $0xd8] sm:$0xff] %v160
      %177 = vst [vmem:[#allocation2 + $0xe0] sm:$0xff] %v161
      %178 = vst [vmem:[#allocation2 + $0xe8] sm:$0xff] %v162
      %179 = vst [vmem:[#allocation2 + $0xf0] sm:$0xff] %v163
      %180 = vst [vmem:[#allocation2 + $0xf8] sm:$0xff] %v164
      %vm181 = vcmask 7168
      %182 = vst.msk [vmem:[#allocation3] sm:$0xff] %vm181, -1e+30
      %183 = vst.msk [vmem:[#allocation3 + $0x8] sm:$0xff] %vm181, -1e+30
      %184 = vst.msk [vmem:[#allocation3 + $0x10] sm:$0xff] %vm181, -1e+30
      %185 = vst.msk [vmem:[#allocation3 + $0x18] sm:$0xff] %vm181, -1e+30
      %186 = vst.msk [vmem:[#allocation3 + $0x20] sm:$0xff] %vm181, -1e+30
      %187 = vst.msk [vmem:[#allocation3 + $0x28] sm:$0xff] %vm181, -1e+30
      %188 = vst.msk [vmem:[#allocation3 + $0x30] sm:$0xff] %vm181, -1e+30
      %189 = vst.msk [vmem:[#allocation3 + $0x38] sm:$0xff] %vm181, -1e+30
      %190 = vst.msk [vmem:[#allocation3 + $0x40] sm:$0xff] %vm181, -1e+30
      %191 = vst.msk [vmem:[#allocation3 + $0x48] sm:$0xff] %vm181, -1e+30
      %192 = vst.msk [vmem:[#allocation3 + $0x50] sm:$0xff] %vm181, -1e+30
      %193 = vst.msk [vmem:[#allocation3 + $0x58] sm:$0xff] %vm181, -1e+30
      %194 = vst.msk [vmem:[#allocation3 + $0x60] sm:$0xff] %vm181, -1e+30
      %195 = vst.msk [vmem:[#allocation3 + $0x68] sm:$0xff] %vm181, -1e+30
      %196 = vst.msk [vmem:[#allocation3 + $0x70] sm:$0xff] %vm181, -1e+30
      %197 = vst.msk [vmem:[#allocation3 + $0x78] sm:$0xff] %vm181, -1e+30
      %198 = vst.msk [vmem:[#allocation3 + $0x80] sm:$0xff] %vm181, -1e+30
      %199 = vst.msk [vmem:[#allocation3 + $0x88] sm:$0xff] %vm181, -1e+30
      %200 = vst.msk [vmem:[#allocation3 + $0x90] sm:$0xff] %vm181, -1e+30
      %201 = vst.msk [vmem:[#allocation3 + $0x98] sm:$0xff] %vm181, -1e+30
      %202 = vst.msk [vmem:[#allocation3 + $0xa0] sm:$0xff] %vm181, -1e+30
      %203 = vst.msk [vmem:[#allocation3 + $0xa8] sm:$0xff] %vm181, -1e+30
      %204 = vst.msk [vmem:[#allocation3 + $0xb0] sm:$0xff] %vm181, -1e+30
      %205 = vst.msk [vmem:[#allocation3 + $0xb8] sm:$0xff] %vm181, -1e+30
      %206 = vst.msk [vmem:[#allocation3 + $0xc0] sm:$0xff] %vm181, -1e+30
      %207 = vst.msk [vmem:[#allocation3 + $0xc8] sm:$0xff] %vm181, -1e+30
      %208 = vst.msk [vmem:[#allocation3 + $0xd0] sm:$0xff] %vm181, -1e+30
      %209 = vst.msk [vmem:[#allocation3 + $0xd8] sm:$0xff] %vm181, -1e+30
      %210 = vst.msk [vmem:[#allocation3 + $0xe0] sm:$0xff] %vm181, -1e+30
      %211 = vst.msk [vmem:[#allocation3 + $0xe8] sm:$0xff] %vm181, -1e+30
      %212 = vst.msk [vmem:[#allocation3 + $0xf0] sm:$0xff] %vm181, -1e+30
      %213 = vst.msk [vmem:[#allocation3 + $0xf8] sm:$0xff] %vm181, -1e+30
      %214 = vst.msk [vmem:[#allocation4] sm:$0xff] %vm181, 0.0
      %215 = vst.msk [vmem:[#allocation4 + $0x8] sm:$0xff] %vm181, 0.0
      %216 = vst.msk [vmem:[#allocation4 + $0x10] sm:$0xff] %vm181, 0.0
      %217 = vst.msk [vmem:[#allocation4 + $0x18] sm:$0xff] %vm181, 0.0
      %218 = vst.msk [vmem:[#allocation4 + $0x20] sm:$0xff] %vm181, 0.0
      %219 = vst.msk [vmem:[#allocation4 + $0x28] sm:$0xff] %vm181, 0.0
      %220 = vst.msk [vmem:[#allocation4 + $0x30] sm:$0xff] %vm181, 0.0
      %221 = vst.msk [vmem:[#allocation4 + $0x38] sm:$0xff] %vm181, 0.0
      %222 = vst.msk [vmem:[#allocation4 + $0x40] sm:$0xff] %vm181, 0.0
      %223 = vst.msk [vmem:[#allocation4 + $0x48] sm:$0xff] %vm181, 0.0
      %224 = vst.msk [vmem:[#allocation4 + $0x50] sm:$0xff] %vm181, 0.0
      %225 = vst.msk [vmem:[#allocation4 + $0x58] sm:$0xff] %vm181, 0.0
      %226 = vst.msk [vmem:[#allocation4 + $0x60] sm:$0xff] %vm181, 0.0
      %227 = vst.msk [vmem:[#allocation4 + $0x68] sm:$0xff] %vm181, 0.0
      %228 = vst.msk [vmem:[#allocation4 + $0x70] sm:$0xff] %vm181, 0.0
      %229 = vst.msk [vmem:[#allocation4 + $0x78] sm:$0xff] %vm181, 0.0
      %230 = vst.msk [vmem:[#allocation4 + $0x80] sm:$0xff] %vm181, 0.0
      %231 = vst.msk [vmem:[#allocation4 + $0x88] sm:$0xff] %vm181, 0.0
      %232 = vst.msk [vmem:[#allocation4 + $0x90] sm:$0xff] %vm181, 0.0
      %233 = vst.msk [vmem:[#allocation4 + $0x98] sm:$0xff] %vm181, 0.0
      %234 = vst.msk [vmem:[#allocation4 + $0xa0] sm:$0xff] %vm181, 0.0
      %235 = vst.msk [vmem:[#allocation4 + $0xa8] sm:$0xff] %vm181, 0.0
      %236 = vst.msk [vmem:[#allocation4 + $0xb0] sm:$0xff] %vm181, 0.0
      %237 = vst.msk [vmem:[#allocation4 + $0xb8] sm:$0xff] %vm181, 0.0
      %238 = vst.msk [vmem:[#allocation4 + $0xc0] sm:$0xff] %vm181, 0.0
      %239 = vst.msk [vmem:[#allocation4 + $0xc8] sm:$0xff] %vm181, 0.0
      %240 = vst.msk [vmem:[#allocation4 + $0xd0] sm:$0xff] %vm181, 0.0
      %241 = vst.msk [vmem:[#allocation4 + $0xd8] sm:$0xff] %vm181, 0.0
      %242 = vst.msk [vmem:[#allocation4 + $0xe0] sm:$0xff] %vm181, 0.0
      %243 = vst.msk [vmem:[#allocation4 + $0xe8] sm:$0xff] %vm181, 0.0
      %244 = vst.msk [vmem:[#allocation4 + $0xf0] sm:$0xff] %vm181, 0.0
      %245 = vst.msk [vmem:[#allocation4 + $0xf8] sm:$0xff] %vm181, 0.0
    $region37: #{tpu_custom_call.1} parent=1 // pred_fallthru
      _
    %v246 = vld [vmem:[#allocation2] sm:$0xff]
    %v247 = vld [vmem:[#allocation2 + $0x8] sm:$0xff]
    %v248 = vld [vmem:[#allocation2 + $0x10] sm:$0xff]
    %v249 = vld [vmem:[#allocation2 + $0x18] sm:$0xff]
    %v250 = vld [vmem:[#allocation2 + $0x20] sm:$0xff]
    %v251 = vld [vmem:[#allocation2 + $0x28] sm:$0xff]
    %v252 = vld [vmem:[#allocation2 + $0x30] sm:$0xff]
    %v253 = vld [vmem:[#allocation2 + $0x38] sm:$0xff]
    %v254 = vld [vmem:[#allocation2 + $0x40] sm:$0xff]
    %v255 = vld [vmem:[#allocation2 + $0x48] sm:$0xff]
    %v256 = vld [vmem:[#allocation2 + $0x50] sm:$0xff]
    %v257 = vld [vmem:[#allocation2 + $0x58] sm:$0xff]
    %v258 = vld [vmem:[#allocation2 + $0x60] sm:$0xff]
    %v259 = vld [vmem:[#allocation2 + $0x68] sm:$0xff]
    %v260 = vld [vmem:[#allocation2 + $0x70] sm:$0xff]
    %v261 = vld [vmem:[#allocation2 + $0x78] sm:$0xff]
    %v262 = vld [vmem:[#allocation2 + $0x80] sm:$0xff]
    %v263 = vld [vmem:[#allocation2 + $0x88] sm:$0xff]
    %v264 = vld [vmem:[#allocation2 + $0x90] sm:$0xff]
    %v265 = vld [vmem:[#allocation2 + $0x98] sm:$0xff]
    %v266 = vld [vmem:[#allocation2 + $0xa0] sm:$0xff]
    %v267 = vld [vmem:[#allocation2 + $0xa8] sm:$0xff]
    %v268 = vld [vmem:[#allocation2 + $0xb0] sm:$0xff]
    %v269 = vld [vmem:[#allocation2 + $0xb8] sm:$0xff]
    %v270 = vld [vmem:[#allocation2 + $0xc0] sm:$0xff]
    %v271 = vld [vmem:[#allocation2 + $0xc8] sm:$0xff]
    %v272 = vld [vmem:[#allocation2 + $0xd0] sm:$0xff]
    %v273 = vld [vmem:[#allocation2 + $0xd8] sm:$0xff]
    %v274 = vld [vmem:[#allocation2 + $0xe0] sm:$0xff]
    %v275 = vld [vmem:[#allocation2 + $0xe8] sm:$0xff]
    %v276 = vld [vmem:[#allocation2 + $0xf0] sm:$0xff]
    %v277 = vld [vmem:[#allocation2 + $0xf8] sm:$0xff]
    %v278 = vld [vmem:[#allocation10] sm:$0xff]
    %v279 = vld [vmem:[#allocation10 + $0x8] sm:$0xff]
    %v280 = vld [vmem:[#allocation10 + $0x10] sm:$0xff]
    %v281 = vld [vmem:[#allocation10 + $0x18] sm:$0xff]
    %v282 = vld [vmem:[#allocation10 + $0x20] sm:$0xff]
    %v283 = vld [vmem:[#allocation10 + $0x28] sm:$0xff]
    %v284 = vld [vmem:[#allocation10 + $0x30] sm:$0xff]
    %v285 = vld [vmem:[#allocation10 + $0x38] sm:$0xff]
    %v286 = vld [vmem:[#allocation10 + $0x40] sm:$0xff]
    %v287 = vld [vmem:[#allocation10 + $0x48] sm:$0xff]
    %v288 = vld [vmem:[#allocation10 + $0x50] sm:$0xff]
    %v289 = vld [vmem:[#allocation10 + $0x58] sm:$0xff]
    %v290 = vld [vmem:[#allocation10 + $0x60] sm:$0xff]
    %v291 = vld [vmem:[#allocation10 + $0x68] sm:$0xff]
    %v292 = vld [vmem:[#allocation10 + $0x70] sm:$0xff]
    %v293 = vld [vmem:[#allocation10 + $0x78] sm:$0xff]
    %v294 = vld [vmem:[#allocation11] sm:$0xff]
    %v295 = vld [vmem:[#allocation11 + $0x8] sm:$0xff]
    %v296 = vld [vmem:[#allocation11 + $0x10] sm:$0xff]
    %v297 = vld [vmem:[#allocation11 + $0x18] sm:$0xff]
    %v298 = vld [vmem:[#allocation11 + $0x20] sm:$0xff]
    %v299 = vld [vmem:[#allocation11 + $0x28] sm:$0xff]
    %v300 = vld [vmem:[#allocation11 + $0x30] sm:$0xff]
    %v301 = vld [vmem:[#allocation11 + $0x38] sm:$0xff]
    %v302 = vld [vmem:[#allocation11 + $0x40] sm:$0xff]
    %v303 = vld [vmem:[#allocation11 + $0x48] sm:$0xff]
    %v304 = vld [vmem:[#allocation11 + $0x50] sm:$0xff]
    %v305 = vld [vmem:[#allocation11 + $0x58] sm:$0xff]
    %v306 = vld [vmem:[#allocation11 + $0x60] sm:$0xff]
    %v307 = vld [vmem:[#allocation11 + $0x68] sm:$0xff]
    %v308 = vld [vmem:[#allocation11 + $0x70] sm:$0xff]
    %v309 = vld [vmem:[#allocation11 + $0x78] sm:$0xff]
    %v310 = vlaneseq
    %v311 = vand.u32 %v310, 127
    %s312 = smul.u32 0, 128
    %v313 = vstv %s312
    %v314 = vadd.s32 %v311, %v313
    %vm315 = vcmp.ge.s32.totalorder %v314, 8
    %v316 = vsel %vm315, -1e+30, 0.0
    %v317 = vlaneseq
    %v318 = vshrl.u32 %v317, 7
    %v319 = vadd.s32 %v318, 8
    %v320 = vadd.s32 %v318, 16
    %v321 = vadd.s32 %v318, 24
    %v322 = vadd.s32 %v318, 32
    %v323 = vadd.s32 %v318, 40
    %v324 = vadd.s32 %v318, 48
    %v325 = vadd.s32 %v318, 56
    %v326 = vadd.s32 %v318, 64
    %v327 = vadd.s32 %v318, 72
    %v328 = vadd.s32 %v318, 80
    %v329 = vadd.s32 %v318, 88
    %v330 = vadd.s32 %v318, 96
    %v331 = vadd.s32 %v318, 104
    %v332 = vadd.s32 %v318, 112
    %v333 = vadd.s32 %v318, 120
    %v334 = vadd.s32 %v318, 128
    %v335 = vadd.s32 %v318, 136
    %v336 = vadd.s32 %v318, 144
    %v337 = vadd.s32 %v318, 152
    %v338 = vadd.s32 %v318, 160
    %v339 = vadd.s32 %v318, 168
    %v340 = vadd.s32 %v318, 176
    %v341 = vadd.s32 %v318, 184
    %v342 = vadd.s32 %v318, 192
    %v343 = vadd.s32 %v318, 200
    %v344 = vadd.s32 %v318, 208
    %v345 = vadd.s32 %v318, 216
    %v346 = vadd.s32 %v318, 224
    %v347 = vadd.s32 %v318, 232
    %v348 = vadd.s32 %v318, 240
    %v349 = vadd.s32 %v318, 248
    %vm350 = vcmp.lt.s32.totalorder %v318, 128
    %vm351 = vcmp.lt.s32.totalorder %v319, 128
    %vm352 = vcmp.lt.s32.totalorder %v320, 128
    %vm353 = vcmp.lt.s32.totalorder %v321, 128
    %vm354 = vcmp.lt.s32.totalorder %v322, 128
    %vm355 = vcmp.lt.s32.totalorder %v323, 128
    %vm356 = vcmp.lt.s32.totalorder %v324, 128
    %vm357 = vcmp.lt.s32.totalorder %v325, 128
    %vm358 = vcmp.lt.s32.totalorder %v326, 128
    %vm359 = vcmp.lt.s32.totalorder %v327, 128
    %vm360 = vcmp.lt.s32.totalorder %v328, 128
    %vm361 = vcmp.lt.s32.totalorder %v329, 128
    %vm362 = vcmp.lt.s32.totalorder %v330, 128
    %vm363 = vcmp.lt.s32.totalorder %v331, 128
    %vm364 = vcmp.lt.s32.totalorder %v332, 128
    %vm365 = vcmp.lt.s32.totalorder %v333, 128
    %vm366 = vcmp.lt.s32.totalorder %v334, 128
    %vm367 = vcmp.lt.s32.totalorder %v335, 128
    %vm368 = vcmp.lt.s32.totalorder %v336, 128
    %vm369 = vcmp.lt.s32.totalorder %v337, 128
    %vm370 = vcmp.lt.s32.totalorder %v338, 128
    %vm371 = vcmp.lt.s32.totalorder %v339, 128
    %vm372 = vcmp.lt.s32.totalorder %v340, 128
    %vm373 = vcmp.lt.s32.totalorder %v341, 128
    %vm374 = vcmp.lt.s32.totalorder %v342, 128
    %vm375 = vcmp.lt.s32.totalorder %v343, 128
    %vm376 = vcmp.lt.s32.totalorder %v344, 128
    %vm377 = vcmp.lt.s32.totalorder %v345, 128
    %vm378 = vcmp.lt.s32.totalorder %v346, 128
    %vm379 = vcmp.lt.s32.totalorder %v347, 128
    %vm380 = vcmp.lt.s32.totalorder %v348, 128
    %vm381 = vcmp.lt.s32.totalorder %v349, 128
    %v382 = vsub.s32 %v318, 128
    %v383 = vsub.s32 %v319, 128
    %v384 = vsub.s32 %v320, 128
    %v385 = vsub.s32 %v321, 128
    %v386 = vsub.s32 %v322, 128
    %v387 = vsub.s32 %v323, 128
    %v388 = vsub.s32 %v324, 128
    %v389 = vsub.s32 %v325, 128
    %v390 = vsub.s32 %v326, 128
    %v391 = vsub.s32 %v327, 128
    %v392 = vsub.s32 %v328, 128
    %v393 = vsub.s32 %v329, 128
    %v394 = vsub.s32 %v330, 128
    %v395 = vsub.s32 %v331, 128
    %v396 = vsub.s32 %v332, 128
    %v397 = vsub.s32 %v333, 128
    %v398 = vsub.s32 %v335, 128
    %v399 = vsub.s32 %v336, 128
    %v400 = vsub.s32 %v337, 128
    %v401 = vsub.s32 %v338, 128
    %v402 = vsub.s32 %v339, 128
    %v403 = vsub.s32 %v340, 128
    %v404 = vsub.s32 %v341, 128
    %v405 = vsub.s32 %v342, 128
    %v406 = vsub.s32 %v343, 128
    %v407 = vsub.s32 %v344, 128
    %v408 = vsub.s32 %v345, 128
    %v409 = vsub.s32 %v346, 128
    %v410 = vsub.s32 %v347, 128
    %v411 = vsub.s32 %v348, 128
    %v412 = vsub.s32 %v349, 128
    %v413 = vsel %vm350, %v318, %v382
    %v414 = vsel %vm351, %v319, %v383
    %v415 = vsel %vm352, %v320, %v384
    %v416 = vsel %vm353, %v321, %v385
    %v417 = vsel %vm354, %v322, %v386
    %v418 = vsel %vm355, %v323, %v387
    %v419 = vsel %vm356, %v324, %v388
    %v420 = vsel %vm357, %v325, %v389
    %v421 = vsel %vm358, %v326, %v390
    %v422 = vsel %vm359, %v327, %v391
    %v423 = vsel %vm360, %v328, %v392
    %v424 = vsel %vm361, %v329, %v393
    %v425 = vsel %vm362, %v330, %v394
    %v426 = vsel %vm363, %v331, %v395
    %v427 = vsel %vm364, %v332, %v396
    %v428 = vsel %vm365, %v333, %v397
    %v429 = vsel %vm366, %v334, %v318
    %v430 = vsel %vm367, %v335, %v398
    %v431 = vsel %vm368, %v336, %v399
    %v432 = vsel %vm369, %v337, %v400
    %v433 = vsel %vm370, %v338, %v401
    %v434 = vsel %vm371, %v339, %v402
    %v435 = vsel %vm372, %v340, %v403
    %v436 = vsel %vm373, %v341, %v404
    %v437 = vsel %vm374, %v342, %v405
    %v438 = vsel %vm375, %v343, %v406
    %v439 = vsel %vm376, %v344, %v407
    %v440 = vsel %vm377, %v345, %v408
    %v441 = vsel %vm378, %v346, %v409
    %v442 = vsel %vm379, %v347, %v410
    %v443 = vsel %vm380, %v348, %v411
    %v444 = vsel %vm381, %v349, %v412
    %s445 = smul.u32 0, 128
    %v446 = vstv %s445
    %v447 = vadd.s32 %v413, %v446
    %v448 = vadd.s32 %v414, %v446
    %v449 = vadd.s32 %v415, %v446
    %v450 = vadd.s32 %v416, %v446
    %v451 = vadd.s32 %v417, %v446
    %v452 = vadd.s32 %v418, %v446
    %v453 = vadd.s32 %v419, %v446
    %v454 = vadd.s32 %v420, %v446
    %v455 = vadd.s32 %v421, %v446
    %v456 = vadd.s32 %v422, %v446
    %v457 = vadd.s32 %v423, %v446
    %v458 = vadd.s32 %v424, %v446
    %v459 = vadd.s32 %v425, %v446
    %v460 = vadd.s32 %v426, %v446
    %v461 = vadd.s32 %v427, %v446
    %v462 = vadd.s32 %v428, %v446
    %v463 = vadd.s32 %v429, %v446
    %v464 = vadd.s32 %v430, %v446
    %v465 = vadd.s32 %v431, %v446
    %v466 = vadd.s32 %v432, %v446
    %v467 = vadd.s32 %v433, %v446
    %v468 = vadd.s32 %v434, %v446
    %v469 = vadd.s32 %v435, %v446
    %v470 = vadd.s32 %v436, %v446
    %v471 = vadd.s32 %v437, %v446
    %v472 = vadd.s32 %v438, %v446
    %v473 = vadd.s32 %v439, %v446
    %v474 = vadd.s32 %v440, %v446
    %v475 = vadd.s32 %v441, %v446
    %v476 = vadd.s32 %v442, %v446
    %v477 = vadd.s32 %v443, %v446
    %v478 = vadd.s32 %v444, %v446
    %vm479 = vcmp.eq.s32.totalorder %v447, %v314
    %vm480 = vcmp.eq.s32.totalorder %v448, %v314
    %vm481 = vcmp.eq.s32.totalorder %v449, %v314
    %vm482 = vcmp.eq.s32.totalorder %v450, %v314
    %vm483 = vcmp.eq.s32.totalorder %v451, %v314
    %vm484 = vcmp.eq.s32.totalorder %v452, %v314
    %vm485 = vcmp.eq.s32.totalorder %v453, %v314
    %vm486 = vcmp.eq.s32.totalorder %v454, %v314
    %vm487 = vcmp.eq.s32.totalorder %v455, %v314
    %vm488 = vcmp.eq.s32.totalorder %v456, %v314
    %vm489 = vcmp.eq.s32.totalorder %v457, %v314
    %vm490 = vcmp.eq.s32.totalorder %v458, %v314
    %vm491 = vcmp.eq.s32.totalorder %v459, %v314
    %vm492 = vcmp.eq.s32.totalorder %v460, %v314
    %vm493 = vcmp.eq.s32.totalorder %v461, %v314
    %vm494 = vcmp.eq.s32.totalorder %v462, %v314
    %vm495 = vcmp.eq.s32.totalorder %v463, %v314
    %vm496 = vcmp.eq.s32.totalorder %v464, %v314
    %vm497 = vcmp.eq.s32.totalorder %v465, %v314
    %vm498 = vcmp.eq.s32.totalorder %v466, %v314
    %vm499 = vcmp.eq.s32.totalorder %v467, %v314
    %vm500 = vcmp.eq.s32.totalorder %v468, %v314
    %vm501 = vcmp.eq.s32.totalorder %v469, %v314
    %vm502 = vcmp.eq.s32.totalorder %v470, %v314
    %vm503 = vcmp.eq.s32.totalorder %v471, %v314
    %vm504 = vcmp.eq.s32.totalorder %v472, %v314
    %vm505 = vcmp.eq.s32.totalorder %v473, %v314
    %vm506 = vcmp.eq.s32.totalorder %v474, %v314
    %vm507 = vcmp.eq.s32.totalorder %v475, %v314
    %vm508 = vcmp.eq.s32.totalorder %v476, %v314
    %vm509 = vcmp.eq.s32.totalorder %v477, %v314
    %vm510 = vcmp.eq.s32.totalorder %v478, %v314
    %v511 = vsel %vm350, 1, 0
    %v512 = vsel %vm351, 1, 0
    %v513 = vsel %vm352, 1, 0
    %v514 = vsel %vm353, 1, 0
    %v515 = vsel %vm354, 1, 0
    %v516 = vsel %vm355, 1, 0
    %v517 = vsel %vm356, 1, 0
    %v518 = vsel %vm357, 1, 0
    %v519 = vsel %vm358, 1, 0
    %v520 = vsel %vm359, 1, 0
    %v521 = vsel %vm360, 1, 0
    %v522 = vsel %vm361, 1, 0
    %v523 = vsel %vm362, 1, 0
    %v524 = vsel %vm363, 1, 0
    %v525 = vsel %vm364, 1, 0
    %v526 = vsel %vm365, 1, 0
    %v527 = vsel %vm366, 1, 0
    %v528 = vsel %vm367, 1, 0
    %v529 = vsel %vm368, 1, 0
    %v530 = vsel %vm369, 1, 0
    %v531 = vsel %vm370, 1, 0
    %v532 = vsel %vm371, 1, 0
    %v533 = vsel %vm372, 1, 0
    %v534 = vsel %vm373, 1, 0
    %v535 = vsel %vm374, 1, 0
    %v536 = vsel %vm375, 1, 0
    %v537 = vsel %vm376, 1, 0
    %v538 = vsel %vm377, 1, 0
    %v539 = vsel %vm378, 1, 0
    %v540 = vsel %vm379, 1, 0
    %v541 = vsel %vm380, 1, 0
    %v542 = vsel %vm381, 1, 0
    %vm543 = vcmp.eq.s32.totalorder %v511, 1
    %vm544 = vcmp.eq.s32.totalorder %v512, 1
    %vm545 = vcmp.eq.s32.totalorder %v513, 1
    %vm546 = vcmp.eq.s32.totalorder %v514, 1
    %vm547 = vcmp.eq.s32.totalorder %v515, 1
    %vm548 = vcmp.eq.s32.totalorder %v516, 1
    %vm549 = vcmp.eq.s32.totalorder %v517, 1
    %vm550 = vcmp.eq.s32.totalorder %v518, 1
    %vm551 = vcmp.eq.s32.totalorder %v519, 1
    %vm552 = vcmp.eq.s32.totalorder %v520, 1
    %vm553 = vcmp.eq.s32.totalorder %v521, 1
    %vm554 = vcmp.eq.s32.totalorder %v522, 1
    %vm555 = vcmp.eq.s32.totalorder %v523, 1
    %vm556 = vcmp.eq.s32.totalorder %v524, 1
    %vm557 = vcmp.eq.s32.totalorder %v525, 1
    %vm558 = vcmp.eq.s32.totalorder %v526, 1
    %vm559 = vcmp.eq.s32.totalorder %v527, 1
    %vm560 = vcmp.eq.s32.totalorder %v528, 1
    %vm561 = vcmp.eq.s32.totalorder %v529, 1
    %vm562 = vcmp.eq.s32.totalorder %v530, 1
    %vm563 = vcmp.eq.s32.totalorder %v531, 1
    %vm564 = vcmp.eq.s32.totalorder %v532, 1
    %vm565 = vcmp.eq.s32.totalorder %v533, 1
    %vm566 = vcmp.eq.s32.totalorder %v534, 1
    %vm567 = vcmp.eq.s32.totalorder %v535, 1
    %vm568 = vcmp.eq.s32.totalorder %v536, 1
    %vm569 = vcmp.eq.s32.totalorder %v537, 1
    %vm570 = vcmp.eq.s32.totalorder %v538, 1
    %vm571 = vcmp.eq.s32.totalorder %v539, 1
    %vm572 = vcmp.eq.s32.totalorder %v540, 1
    %vm573 = vcmp.eq.s32.totalorder %v541, 1
    %vm574 = vcmp.eq.s32.totalorder %v542, 1
    %vm575 = vmand %vm479, %vm543
    %vm576 = vmand %vm480, %vm544
    %vm577 = vmand %vm481, %vm545
    %vm578 = vmand %vm482, %vm546
    %vm579 = vmand %vm483, %vm547
    %vm580 = vmand %vm484, %vm548
    %vm581 = vmand %vm485, %vm549
    %vm582 = vmand %vm486, %vm550
    %vm583 = vmand %vm487, %vm551
    %vm584 = vmand %vm488, %vm552
    %vm585 = vmand %vm489, %vm553
    %vm586 = vmand %vm490, %vm554
    %vm587 = vmand %vm491, %vm555
    %vm588 = vmand %vm492, %vm556
    %vm589 = vmand %vm493, %vm557
    %vm590 = vmand %vm494, %vm558
    %vm591 = vmand %vm495, %vm559
    %vm592 = vmand %vm496, %vm560
    %vm593 = vmand %vm497, %vm561
    %vm594 = vmand %vm498, %vm562
    %vm595 = vmand %vm499, %vm563
    %vm596 = vmand %vm500, %vm564
    %vm597 = vmand %vm501, %vm565
    %vm598 = vmand %vm502, %vm566
    %vm599 = vmand %vm503, %vm567
    %vm600 = vmand %vm504, %vm568
    %vm601 = vmand %vm505, %vm569
    %vm602 = vmand %vm506, %vm570
    %vm603 = vmand %vm507, %vm571
    %vm604 = vmand %vm508, %vm572
    %vm605 = vmand %vm509, %vm573
    %vm606 = vmand %vm510, %vm574
    %607 = vmatpush.xpose.msra.mxu0 %v293
    %608 = vmatpush.xpose.msra.mxu0 %v292
    %609 = vmatpush.xpose.msra.mxu0 %v291
    %610 = vmatpush.xpose.msra.mxu0 %v290
    %611 = vmatpush.xpose.msra.mxu0 %v289
    %612 = vmatpush.xpose.msra.mxu0 %v288
    %613 = vmatpush.xpose.msra.mxu0 %v287
    %614 = vmatpush.xpose.msra.mxu0 %v286
    %615 = vmatpush.xpose.msra.mxu0 %v285
    %616 = vmatpush.xpose.msra.mxu0 %v284
    %617 = vmatpush.xpose.msra.mxu0 %v283
    %618 = vmatpush.xpose.msra.mxu0 %v282
    %619 = vmatpush.xpose.msra.mxu0 %v281
    %620 = vmatpush.xpose.msra.mxu0 %v280
    %621 = vmatpush.xpose.msra.mxu0 %v279
    %622 = vmatpush.xpose.msra.mxu0 %v278
    %623 = vmatmul.f32.gmra.mxu0 %v246
    %v624 = vpop.f32.mrf.mxu0
    %v625 = vadd.f32 %v316, %v624
    %626 = vmatmul.f32.gmra.mxu0 %v247
    %v627 = vpop.f32.mrf.mxu0
    %v628 = vadd.f32 %v316, %v627
    %629 = vmatmul.f32.gmra.mxu0 %v248
    %v630 = vpop.f32.mrf.mxu0
    %v631 = vadd.f32 %v316, %v630
    %632 = vmatmul.f32.gmra.mxu0 %v249
    %v633 = vpop.f32.mrf.mxu0
    %v634 = vadd.f32 %v316, %v633
    %635 = vmatmul.f32.gmra.mxu0 %v250
    %v636 = vpop.f32.mrf.mxu0
    %v637 = vadd.f32 %v316, %v636
    %638 = vmatmul.f32.gmra.mxu0 %v251
    %v639 = vpop.f32.mrf.mxu0
    %v640 = vadd.f32 %v316, %v639
    %641 = vmatmul.f32.gmra.mxu0 %v252
    %v642 = vpop.f32.mrf.mxu0
    %v643 = vadd.f32 %v316, %v642
    %644 = vmatmul.f32.gmra.mxu0 %v253
    %v645 = vpop.f32.mrf.mxu0
    %v646 = vadd.f32 %v316, %v645
    %647 = vmatmul.f32.gmra.mxu0 %v254
    %v648 = vpop.f32.mrf.mxu0
    %v649 = vadd.f32 %v316, %v648
    %650 = vmatmul.f32.gmra.mxu0 %v255
    %v651 = vpop.f32.mrf.mxu0
    %v652 = vadd.f32 %v316, %v651
    %653 = vmatmul.f32.gmra.mxu0 %v256
    %v654 = vpop.f32.mrf.mxu0
    %v655 = vadd.f32 %v316, %v654
    %656 = vmatmul.f32.gmra.mxu0 %v257
    %v657 = vpop.f32.mrf.mxu0
    %v658 = vadd.f32 %v316, %v657
    %659 = vmatmul.f32.gmra.mxu0 %v258
    %v660 = vpop.f32.mrf.mxu0
    %v661 = vadd.f32 %v316, %v660
    %662 = vmatmul.f32.gmra.mxu0 %v259
    %v663 = vpop.f32.mrf.mxu0
    %v664 = vadd.f32 %v316, %v663
    %665 = vmatmul.f32.gmra.mxu0 %v260
    %v666 = vpop.f32.mrf.mxu0
    %v667 = vadd.f32 %v316, %v666
    %668 = vmatmul.f32.gmra.mxu0 %v261
    %v669 = vpop.f32.mrf.mxu0
    %v670 = vadd.f32 %v316, %v669
    %671 = vmatmul.f32.gmra.mxu0 %v262
    %v672 = vpop.f32.mrf.mxu0
    %v673 = vadd.f32 %v316, %v672
    %674 = vmatmul.f32.gmra.mxu0 %v263
    %v675 = vpop.f32.mrf.mxu0
    %v676 = vadd.f32 %v316, %v675
    %677 = vmatmul.f32.gmra.mxu0 %v264
    %v678 = vpop.f32.mrf.mxu0
    %v679 = vadd.f32 %v316, %v678
    %680 = vmatmul.f32.gmra.mxu0 %v265
    %v681 = vpop.f32.mrf.mxu0
    %v682 = vadd.f32 %v316, %v681
    %683 = vmatmul.f32.gmra.mxu0 %v266
    %v684 = vpop.f32.mrf.mxu0
    %v685 = vadd.f32 %v316, %v684
    %686 = vmatmul.f32.gmra.mxu0 %v267
    %v687 = vpop.f32.mrf.mxu0
    %v688 = vadd.f32 %v316, %v687
    %689 = vmatmul.f32.gmra.mxu0 %v268
    %v690 = vpop.f32.mrf.mxu0
    %v691 = vadd.f32 %v316, %v690
    %692 = vmatmul.f32.gmra.mxu0 %v269
    %v693 = vpop.f32.mrf.mxu0
    %v694 = vadd.f32 %v316, %v693
    %695 = vmatmul.f32.gmra.mxu0 %v270
    %v696 = vpop.f32.mrf.mxu0
    %v697 = vadd.f32 %v316, %v696
    %698 = vmatmul.f32.gmra.mxu0 %v271
    %v699 = vpop.f32.mrf.mxu0
    %v700 = vadd.f32 %v316, %v699
    %701 = vmatmul.f32.gmra.mxu0 %v272
    %v702 = vpop.f32.mrf.mxu0
    %v703 = vadd.f32 %v316, %v702
    %704 = vmatmul.f32.gmra.mxu0 %v273
    %v705 = vpop.f32.mrf.mxu0
    %v706 = vadd.f32 %v316, %v705
    %707 = vmatmul.f32.gmra.mxu0 %v274
    %v708 = vpop.f32.mrf.mxu0
    %v709 = vadd.f32 %v316, %v708
    %710 = vmatmul.f32.gmra.mxu0 %v275
    %v711 = vpop.f32.mrf.mxu0
    %v712 = vadd.f32 %v316, %v711
    %713 = vmatmul.f32.gmra.mxu0 %v276
    %v714 = vpop.f32.mrf.mxu0
    %v715 = vadd.f32 %v316, %v714
    %716 = vmatmul.f32.gmra.mxu0 %v277
    %v717 = vpop.f32.mrf.mxu0
    %v718 = vadd.f32 %v316, %v717
    %719 = vdwg.mxu0
    %v720 = vsel %vm575, -1e+30, %v625
    %v721 = vsel %vm576, -1e+30, %v628
    %v722 = vsel %vm577, -1e+30, %v631
    %v723 = vsel %vm578, -1e+30, %v634
    %v724 = vsel %vm579, -1e+30, %v637
    %v725 = vsel %vm580, -1e+30, %v640
    %v726 = vsel %vm581, -1e+30, %v643
    %v727 = vsel %vm582, -1e+30, %v646
    %v728 = vsel %vm583, -1e+30, %v649
    %v729 = vsel %vm584, -1e+30, %v652
    %v730 = vsel %vm585, -1e+30, %v655
    %v731 = vsel %vm586, -1e+30, %v658
    %v732 = vsel %vm587, -1e+30, %v661
    %v733 = vsel %vm588, -1e+30, %v664
    %v734 = vsel %vm589, -1e+30, %v667
    %v735 = vsel %vm590, -1e+30, %v670
    %v736 = vsel %vm591, -1e+30, %v673
    %v737 = vsel %vm592, -1e+30, %v676
    %v738 = vsel %vm593, -1e+30, %v679
    %v739 = vsel %vm594, -1e+30, %v682
    %v740 = vsel %vm595, -1e+30, %v685
    %v741 = vsel %vm596, -1e+30, %v688
    %v742 = vsel %vm597, -1e+30, %v691
    %v743 = vsel %vm598, -1e+30, %v694
    %v744 = vsel %vm599, -1e+30, %v697
    %v745 = vsel %vm600, -1e+30, %v700
    %v746 = vsel %vm601, -1e+30, %v703
    %v747 = vsel %vm602, -1e+30, %v706
    %v748 = vsel %vm603, -1e+30, %v709
    %v749 = vsel %vm604, -1e+30, %v712
    %v750 = vsel %vm605, -1e+30, %v715
    %v751 = vsel %vm606, -1e+30, %v718
    %vm752 = vmxor %vm350, 1
    %vm753 = vmxor %vm351, 1
    %vm754 = vmxor %vm352, 1
    %vm755 = vmxor %vm353, 1
    %vm756 = vmxor %vm354, 1
    %vm757 = vmxor %vm355, 1
    %vm758 = vmxor %vm356, 1
    %vm759 = vmxor %vm357, 1
    %vm760 = vmxor %vm358, 1
    %vm761 = vmxor %vm359, 1
    %vm762 = vmxor %vm360, 1
    %vm763 = vmxor %vm361, 1
    %vm764 = vmxor %vm362, 1
    %vm765 = vmxor %vm363, 1
    %vm766 = vmxor %vm364, 1
    %vm767 = vmxor %vm365, 1
    %vm768 = vmxor %vm366, 1
    %vm769 = vmxor %vm367, 1
    %vm770 = vmxor %vm368, 1
    %vm771 = vmxor %vm369, 1
    %vm772 = vmxor %vm370, 1
    %vm773 = vmxor %vm371, 1
    %vm774 = vmxor %vm372, 1
    %vm775 = vmxor %vm373, 1
    %vm776 = vmxor %vm374, 1
    %vm777 = vmxor %vm375, 1
    %vm778 = vmxor %vm376, 1
    %vm779 = vmxor %vm377, 1
    %vm780 = vmxor %vm378, 1
    %vm781 = vmxor %vm379, 1
    %vm782 = vmxor %vm380, 1
    %vm783 = vmxor %vm381, 1
    %v784 = vsel %vm752, 1, 0
    %v785 = vsel %vm753, 1, 0
    %v786 = vsel %vm754, 1, 0
    %v787 = vsel %vm755, 1, 0
    %v788 = vsel %vm756, 1, 0
    %v789 = vsel %vm757, 1, 0
    %v790 = vsel %vm758, 1, 0
    %v791 = vsel %vm759, 1, 0
    %v792 = vsel %vm760, 1, 0
    %v793 = vsel %vm761, 1, 0
    %v794 = vsel %vm762, 1, 0
    %v795 = vsel %vm763, 1, 0
    %v796 = vsel %vm764, 1, 0
    %v797 = vsel %vm765, 1, 0
    %v798 = vsel %vm766, 1, 0
    %v799 = vsel %vm767, 1, 0
    %v800 = vsel %vm768, 1, 0
    %v801 = vsel %vm769, 1, 0
    %v802 = vsel %vm770, 1, 0
    %v803 = vsel %vm771, 1, 0
    %v804 = vsel %vm772, 1, 0
    %v805 = vsel %vm773, 1, 0
    %v806 = vsel %vm774, 1, 0
    %v807 = vsel %vm775, 1, 0
    %v808 = vsel %vm776, 1, 0
    %v809 = vsel %vm777, 1, 0
    %v810 = vsel %vm778, 1, 0
    %v811 = vsel %vm779, 1, 0
    %v812 = vsel %vm780, 1, 0
    %v813 = vsel %vm781, 1, 0
    %v814 = vsel %vm782, 1, 0
    %v815 = vsel %vm783, 1, 0
    %vm816 = vcmp.eq.s32.totalorder %v784, 1
    %vm817 = vcmp.eq.s32.totalorder %v785, 1
    %vm818 = vcmp.eq.s32.totalorder %v786, 1
    %vm819 = vcmp.eq.s32.totalorder %v787, 1
    %vm820 = vcmp.eq.s32.totalorder %v788, 1
    %vm821 = vcmp.eq.s32.totalorder %v789, 1
    %vm822 = vcmp.eq.s32.totalorder %v790, 1
    %vm823 = vcmp.eq.s32.totalorder %v791, 1
    %vm824 = vcmp.eq.s32.totalorder %v792, 1
    %vm825 = vcmp.eq.s32.totalorder %v793, 1
    %vm826 = vcmp.eq.s32.totalorder %v794, 1
    %vm827 = vcmp.eq.s32.totalorder %v795, 1
    %vm828 = vcmp.eq.s32.totalorder %v796, 1
    %vm829 = vcmp.eq.s32.totalorder %v797, 1
    %vm830 = vcmp.eq.s32.totalorder %v798, 1
    %vm831 = vcmp.eq.s32.totalorder %v799, 1
    %vm832 = vcmp.eq.s32.totalorder %v800, 1
    %vm833 = vcmp.eq.s32.totalorder %v801, 1
    %vm834 = vcmp.eq.s32.totalorder %v802, 1
    %vm835 = vcmp.eq.s32.totalorder %v803, 1
    %vm836 = vcmp.eq.s32.totalorder %v804, 1
    %vm837 = vcmp.eq.s32.totalorder %v805, 1
    %vm838 = vcmp.eq.s32.totalorder %v806, 1
    %vm839 = vcmp.eq.s32.totalorder %v807, 1
    %vm840 = vcmp.eq.s32.totalorder %v808, 1
    %vm841 = vcmp.eq.s32.totalorder %v809, 1
    %vm842 = vcmp.eq.s32.totalorder %v810, 1
    %vm843 = vcmp.eq.s32.totalorder %v811, 1
    %vm844 = vcmp.eq.s32.totalorder %v812, 1
    %vm845 = vcmp.eq.s32.totalorder %v813, 1
    %vm846 = vcmp.eq.s32.totalorder %v814, 1
    %vm847 = vcmp.eq.s32.totalorder %v815, 1
    %vm848 = vmand %vm479, %vm816
    %vm849 = vmand %vm480, %vm817
    %vm850 = vmand %vm481, %vm818
    %vm851 = vmand %vm482, %vm819
    %vm852 = vmand %vm483, %vm820
    %vm853 = vmand %vm484, %vm821
    %vm854 = vmand %vm485, %vm822
    %vm855 = vmand %vm486, %vm823
    %vm856 = vmand %vm487, %vm824
    %vm857 = vmand %vm488, %vm825
    %vm858 = vmand %vm489, %vm826
    %vm859 = vmand %vm490, %vm827
    %vm860 = vmand %vm491, %vm828
    %vm861 = vmand %vm492, %vm829
    %vm862 = vmand %vm493, %vm830
    %vm863 = vmand %vm494, %vm831
    %vm864 = vmand %vm495, %vm832
    %vm865 = vmand %vm496, %vm833
    %vm866 = vmand %vm497, %vm834
    %vm867 = vmand %vm498, %vm835
    %vm868 = vmand %vm499, %vm836
    %vm869 = vmand %vm500, %vm837
    %vm870 = vmand %vm501, %vm838
    %vm871 = vmand %vm502, %vm839
    %vm872 = vmand %vm503, %vm840
    %vm873 = vmand %vm504, %vm841
    %vm874 = vmand %vm505, %vm842
    %vm875 = vmand %vm506, %vm843
    %vm876 = vmand %vm507, %vm844
    %vm877 = vmand %vm508, %vm845
    %vm878 = vmand %vm509, %vm846
    %vm879 = vmand %vm510, %vm847
    %880 = vmatpush.xpose.msra.mxu0 %v309
    %881 = vmatpush.xpose.msra.mxu0 %v308
    %882 = vmatpush.xpose.msra.mxu0 %v307
    %883 = vmatpush.xpose.msra.mxu0 %v306
    %884 = vmatpush.xpose.msra.mxu0 %v305
    %885 = vmatpush.xpose.msra.mxu0 %v304
    %886 = vmatpush.xpose.msra.mxu0 %v303
    %887 = vmatpush.xpose.msra.mxu0 %v302
    %888 = vmatpush.xpose.msra.mxu0 %v301
    %889 = vmatpush.xpose.msra.mxu0 %v300
    %890 = vmatpush.xpose.msra.mxu0 %v299
    %891 = vmatpush.xpose.msra.mxu0 %v298
    %892 = vmatpush.xpose.msra.mxu0 %v297
    %893 = vmatpush.xpose.msra.mxu0 %v296
    %894 = vmatpush.xpose.msra.mxu0 %v295
    %895 = vmatpush.xpose.msra.mxu0 %v294
    %896 = vmatmul.f32.gmra.mxu0 %v246
    %v897 = vpop.f32.mrf.mxu0
    %v898 = vadd.f32 %v316, %v897
    %899 = vmatmul.f32.gmra.mxu0 %v247
    %v900 = vpop.f32.mrf.mxu0
    %v901 = vadd.f32 %v316, %v900
    %902 = vmatmul.f32.gmra.mxu0 %v248
    %v903 = vpop.f32.mrf.mxu0
    %v904 = vadd.f32 %v316, %v903
    %905 = vmatmul.f32.gmra.mxu0 %v249
    %v906 = vpop.f32.mrf.mxu0
    %v907 = vadd.f32 %v316, %v906
    %908 = vmatmul.f32.gmra.mxu0 %v250
    %v909 = vpop.f32.mrf.mxu0
    %v910 = vadd.f32 %v316, %v909
    %911 = vmatmul.f32.gmra.mxu0 %v251
    %v912 = vpop.f32.mrf.mxu0
    %v913 = vadd.f32 %v316, %v912
    %914 = vmatmul.f32.gmra.mxu0 %v252
    %v915 = vpop.f32.mrf.mxu0
    %v916 = vadd.f32 %v316, %v915
    %917 = vmatmul.f32.gmra.mxu0 %v253
    %v918 = vpop.f32.mrf.mxu0
    %v919 = vadd.f32 %v316, %v918
    %920 = vmatmul.f32.gmra.mxu0 %v254
    %v921 = vpop.f32.mrf.mxu0
    %v922 = vadd.f32 %v316, %v921
    %923 = vmatmul.f32.gmra.mxu0 %v255
    %v924 = vpop.f32.mrf.mxu0
    %v925 = vadd.f32 %v316, %v924
    %926 = vmatmul.f32.gmra.mxu0 %v256
    %v927 = vpop.f32.mrf.mxu0
    %v928 = vadd.f32 %v316, %v927
    %929 = vmatmul.f32.gmra.mxu0 %v257
    %v930 = vpop.f32.mrf.mxu0
    %v931 = vadd.f32 %v316, %v930
    %932 = vmatmul.f32.gmra.mxu0 %v258
    %v933 = vpop.f32.mrf.mxu0
    %v934 = vadd.f32 %v316, %v933
    %935 = vmatmul.f32.gmra.mxu0 %v259
    %v936 = vpop.f32.mrf.mxu0
    %v937 = vadd.f32 %v316, %v936
    %938 = vmatmul.f32.gmra.mxu0 %v260
    %v939 = vpop.f32.mrf.mxu0
    %v940 = vadd.f32 %v316, %v939
    %941 = vmatmul.f32.gmra.mxu0 %v261
    %v942 = vpop.f32.mrf.mxu0
    %v943 = vadd.f32 %v316, %v942
    %944 = vmatmul.f32.gmra.mxu0 %v262
    %v945 = vpop.f32.mrf.mxu0
    %v946 = vadd.f32 %v316, %v945
    %947 = vmatmul.f32.gmra.mxu0 %v263
    %v948 = vpop.f32.mrf.mxu0
    %v949 = vadd.f32 %v316, %v948
    %950 = vmatmul.f32.gmra.mxu0 %v264
    %v951 = vpop.f32.mrf.mxu0
    %v952 = vadd.f32 %v316, %v951
    %953 = vmatmul.f32.gmra.mxu0 %v265
    %v954 = vpop.f32.mrf.mxu0
    %v955 = vadd.f32 %v316, %v954
    %956 = vmatmul.f32.gmra.mxu0 %v266
    %v957 = vpop.f32.mrf.mxu0
    %v958 = vadd.f32 %v316, %v957
    %959 = vmatmul.f32.gmra.mxu0 %v267
    %v960 = vpop.f32.mrf.mxu0
    %v961 = vadd.f32 %v316, %v960
    %962 = vmatmul.f32.gmra.mxu0 %v268
    %v963 = vpop.f32.mrf.mxu0
    %v964 = vadd.f32 %v316, %v963
    %965 = vmatmul.f32.gmra.mxu0 %v269
    %v966 = vpop.f32.mrf.mxu0
    %v967 = vadd.f32 %v316, %v966
    %968 = vmatmul.f32.gmra.mxu0 %v270
    %v969 = vpop.f32.mrf.mxu0
    %v970 = vadd.f32 %v316, %v969
    %971 = vmatmul.f32.gmra.mxu0 %v271
    %v972 = vpop.f32.mrf.mxu0
    %v973 = vadd.f32 %v316, %v972
    %974 = vmatmul.f32.gmra.mxu0 %v272
    %v975 = vpop.f32.mrf.mxu0
    %v976 = vadd.f32 %v316, %v975
    %977 = vmatmul.f32.gmra.mxu0 %v273
    %v978 = vpop.f32.mrf.mxu0
    %v979 = vadd.f32 %v316, %v978
    %980 = vmatmul.f32.gmra.mxu0 %v274
    %v981 = vpop.f32.mrf.mxu0
    %v982 = vadd.f32 %v316, %v981
    %983 = vmatmul.f32.gmra.mxu0 %v275
    %v984 = vpop.f32.mrf.mxu0
    %v985 = vadd.f32 %v316, %v984
    %986 = vmatmul.f32.gmra.mxu0 %v276
    %v987 = vpop.f32.mrf.mxu0
    %v988 = vadd.f32 %v316, %v987
    %989 = vmatmul.f32.gmra.mxu0 %v277
    %v990 = vpop.f32.mrf.mxu0
    %v991 = vadd.f32 %v316, %v990
    %992 = vdwg.mxu0
    %v993 = vsel %vm848, -1e+30, %v898
    %v994 = vsel %vm849, -1e+30, %v901
    %v995 = vsel %vm850, -1e+30, %v904
    %v996 = vsel %vm851, -1e+30, %v907
    %v997 = vsel %vm852, -1e+30, %v910
    %v998 = vsel %vm853, -1e+30, %v913
    %v999 = vsel %vm854, -1e+30, %v916
    %v1000 = vsel %vm855, -1e+30, %v919
    %v1001 = vsel %vm856, -1e+30, %v922
    %v1002 = vsel %vm857, -1e+30, %v925
    %v1003 = vsel %vm858, -1e+30, %v928
    %v1004 = vsel %vm859, -1e+30, %v931
    %v1005 = vsel %vm860, -1e+30, %v934
    %v1006 = vsel %vm861, -1e+30, %v937
    %v1007 = vsel %vm862, -1e+30, %v940
    %v1008 = vsel %vm863, -1e+30, %v943
    %v1009 = vsel %vm864, -1e+30, %v946
    %v1010 = vsel %vm865, -1e+30, %v949
    %v1011 = vsel %vm866, -1e+30, %v952
    %v1012 = vsel %vm867, -1e+30, %v955
    %v1013 = vsel %vm868, -1e+30, %v958
    %v1014 = vsel %vm869, -1e+30, %v961
    %v1015 = vsel %vm870, -1e+30, %v964
    %v1016 = vsel %vm871, -1e+30, %v967
    %v1017 = vsel %vm872, -1e+30, %v970
    %v1018 = vsel %vm873, -1e+30, %v973
    %v1019 = vsel %vm874, -1e+30, %v976
    %v1020 = vsel %vm875, -1e+30, %v979
    %v1021 = vsel %vm876, -1e+30, %v982
    %v1022 = vsel %vm877, -1e+30, %v985
    %v1023 = vsel %vm878, -1e+30, %v988
    %v1024 = vsel %vm879, -1e+30, %v991
    %v1025 = vld [vmem:[#allocation3] sm:$0xff]
    %v1026 = vld [vmem:[#allocation3 + $0x8] sm:$0xff]
    %v1027 = vld [vmem:[#allocation3 + $0x10] sm:$0xff]
    %v1028 = vld [vmem:[#allocation3 + $0x18] sm:$0xff]
    %v1029 = vld [vmem:[#allocation3 + $0x20] sm:$0xff]
    %v1030 = vld [vmem:[#allocation3 + $0x28] sm:$0xff]
    %v1031 = vld [vmem:[#allocation3 + $0x30] sm:$0xff]
    %v1032 = vld [vmem:[#allocation3 + $0x38] sm:$0xff]
    %v1033 = vld [vmem:[#allocation3 + $0x40] sm:$0xff]
    %v1034 = vld [vmem:[#allocation3 + $0x48] sm:$0xff]
    %v1035 = vld [vmem:[#allocation3 + $0x50] sm:$0xff]
    %v1036 = vld [vmem:[#allocation3 + $0x58] sm:$0xff]
    %v1037 = vld [vmem:[#allocation3 + $0x60] sm:$0xff]
    %v1038 = vld [vmem:[#allocation3 + $0x68] sm:$0xff]
    %v1039 = vld [vmem:[#allocation3 + $0x70] sm:$0xff]
    %v1040 = vld [vmem:[#allocation3 + $0x78] sm:$0xff]
    %v1041 = vld [vmem:[#allocation3 + $0x80] sm:$0xff]
    %v1042 = vld [vmem:[#allocation3 + $0x88] sm:$0xff]
    %v1043 = vld [vmem:[#allocation3 + $0x90] sm:$0xff]
    %v1044 = vld [vmem:[#allocation3 + $0x98] sm:$0xff]
    %v1045 = vld [vmem:[#allocation3 + $0xa0] sm:$0xff]
    %v1046 = vld [vmem:[#allocation3 + $0xa8] sm:$0xff]
    %v1047 = vld [vmem:[#allocation3 + $0xb0] sm:$0xff]
    %v1048 = vld [vmem:[#allocation3 + $0xb8] sm:$0xff]
    %v1049 = vld [vmem:[#allocation3 + $0xc0] sm:$0xff]
    %v1050 = vld [vmem:[#allocation3 + $0xc8] sm:$0xff]
    %v1051 = vld [vmem:[#allocation3 + $0xd0] sm:$0xff]
    %v1052 = vld [vmem:[#allocation3 + $0xd8] sm:$0xff]
    %v1053 = vld [vmem:[#allocation3 + $0xe0] sm:$0xff]
    %v1054 = vld [vmem:[#allocation3 + $0xe8] sm:$0xff]
    %v1055 = vld [vmem:[#allocation3 + $0xf0] sm:$0xff]
    %v1056 = vld [vmem:[#allocation3 + $0xf8] sm:$0xff]
    %1057 = vmax.xlane.f32.xlu0 %v720
    %v1058 = vpop.xlane.xlu0 %1057
    %1059 = vmax.xlane.f32.xlu0 %v721
    %v1060 = vpop.xlane.xlu0 %1059
    %1061 = vmax.xlane.f32.xlu0 %v722
    %v1062 = vpop.xlane.xlu0 %1061
    %1063 = vmax.xlane.f32.xlu0 %v723
    %v1064 = vpop.xlane.xlu0 %1063
    %1065 = vmax.xlane.f32.xlu0 %v724
    %v1066 = vpop.xlane.xlu0 %1065
    %1067 = vmax.xlane.f32.xlu0 %v725
    %v1068 = vpop.xlane.xlu0 %1067
    %1069 = vmax.xlane.f32.xlu0 %v726
    %v1070 = vpop.xlane.xlu0 %1069
    %1071 = vmax.xlane.f32.xlu0 %v727
    %v1072 = vpop.xlane.xlu0 %1071
    %1073 = vmax.xlane.f32.xlu0 %v728
    %v1074 = vpop.xlane.xlu0 %1073
    %1075 = vmax.xlane.f32.xlu0 %v729
    %v1076 = vpop.xlane.xlu0 %1075
    %1077 = vmax.xlane.f32.xlu0 %v730
    %v1078 = vpop.xlane.xlu0 %1077
    %1079 = vmax.xlane.f32.xlu0 %v731
    %v1080 = vpop.xlane.xlu0 %1079
    %1081 = vmax.xlane.f32.xlu0 %v732
    %v1082 = vpop.xlane.xlu0 %1081
    %1083 = vmax.xlane.f32.xlu0 %v733
    %v1084 = vpop.xlane.xlu0 %1083
    %1085 = vmax.xlane.f32.xlu0 %v734
    %v1086 = vpop.xlane.xlu0 %1085
    %1087 = vmax.xlane.f32.xlu0 %v735
    %v1088 = vpop.xlane.xlu0 %1087
    %1089 = vmax.xlane.f32.xlu0 %v736
    %v1090 = vpop.xlane.xlu0 %1089
    %1091 = vmax.xlane.f32.xlu0 %v737
    %v1092 = vpop.xlane.xlu0 %1091
    %1093 = vmax.xlane.f32.xlu0 %v738
    %v1094 = vpop.xlane.xlu0 %1093
    %1095 = vmax.xlane.f32.xlu0 %v739
    %v1096 = vpop.xlane.xlu0 %1095
    %1097 = vmax.xlane.f32.xlu0 %v740
    %v1098 = vpop.xlane.xlu0 %1097
    %1099 = vmax.xlane.f32.xlu0 %v741
    %v1100 = vpop.xlane.xlu0 %1099
    %1101 = vmax.xlane.f32.xlu0 %v742
    %v1102 = vpop.xlane.xlu0 %1101
    %1103 = vmax.xlane.f32.xlu0 %v743
    %v1104 = vpop.xlane.xlu0 %1103
    %1105 = vmax.xlane.f32.xlu0 %v744
    %v1106 = vpop.xlane.xlu0 %1105
    %1107 = vmax.xlane.f32.xlu0 %v745
    %v1108 = vpop.xlane.xlu0 %1107
    %1109 = vmax.xlane.f32.xlu0 %v746
    %v1110 = vpop.xlane.xlu0 %1109
    %1111 = vmax.xlane.f32.xlu0 %v747
    %v1112 = vpop.xlane.xlu0 %1111
    %1113 = vmax.xlane.f32.xlu0 %v748
    %v1114 = vpop.xlane.xlu0 %1113
    %1115 = vmax.xlane.f32.xlu0 %v749
    %v1116 = vpop.xlane.xlu0 %1115
    %1117 = vmax.xlane.f32.xlu0 %v750
    %v1118 = vpop.xlane.xlu0 %1117
    %1119 = vmax.xlane.f32.xlu0 %v751
    %v1120 = vpop.xlane.xlu0 %1119
    %1121 = vmax.xlane.f32.xlu0 %v993
    %v1122 = vpop.xlane.xlu0 %1121
    %1123 = vmax.xlane.f32.xlu0 %v994
    %v1124 = vpop.xlane.xlu0 %1123
    %1125 = vmax.xlane.f32.xlu0 %v995
    %v1126 = vpop.xlane.xlu0 %1125
    %1127 = vmax.xlane.f32.xlu0 %v996
    %v1128 = vpop.xlane.xlu0 %1127
    %1129 = vmax.xlane.f32.xlu0 %v997
    %v1130 = vpop.xlane.xlu0 %1129
    %1131 = vmax.xlane.f32.xlu0 %v998
    %v1132 = vpop.xlane.xlu0 %1131
    %1133 = vmax.xlane.f32.xlu0 %v999
    %v1134 = vpop.xlane.xlu0 %1133
    %1135 = vmax.xlane.f32.xlu0 %v1000
    %v1136 = vpop.xlane.xlu0 %1135
    %1137 = vmax.xlane.f32.xlu0 %v1001
    %v1138 = vpop.xlane.xlu0 %1137
    %1139 = vmax.xlane.f32.xlu0 %v1002
    %v1140 = vpop.xlane.xlu0 %1139
    %1141 = vmax.xlane.f32.xlu0 %v1003
    %v1142 = vpop.xlane.xlu0 %1141
    %1143 = vmax.xlane.f32.xlu0 %v1004
    %v1144 = vpop.xlane.xlu0 %1143
    %1145 = vmax.xlane.f32.xlu0 %v1005
    %v1146 = vpop.xlane.xlu0 %1145
    %1147 = vmax.xlane.f32.xlu0 %v1006
    %v1148 = vpop.xlane.xlu0 %1147
    %1149 = vmax.xlane.f32.xlu0 %v1007
    %v1150 = vpop.xlane.xlu0 %1149
    %1151 = vmax.xlane.f32.xlu0 %v1008
    %v1152 = vpop.xlane.xlu0 %1151
    %1153 = vmax.xlane.f32.xlu0 %v1009
    %v1154 = vpop.xlane.xlu0 %1153
    %1155 = vmax.xlane.f32.xlu0 %v1010
    %v1156 = vpop.xlane.xlu0 %1155
    %1157 = vmax.xlane.f32.xlu0 %v1011
    %v1158 = vpop.xlane.xlu0 %1157
    %1159 = vmax.xlane.f32.xlu0 %v1012
    %v1160 = vpop.xlane.xlu0 %1159
    %1161 = vmax.xlane.f32.xlu0 %v1013
    %v1162 = vpop.xlane.xlu0 %1161
    %1163 = vmax.xlane.f32.xlu0 %v1014
    %v1164 = vpop.xlane.xlu0 %1163
    %1165 = vmax.xlane.f32.xlu0 %v1015
    %v1166 = vpop.xlane.xlu0 %1165
    %1167 = vmax.xlane.f32.xlu0 %v1016
    %v1168 = vpop.xlane.xlu0 %1167
    %1169 = vmax.xlane.f32.xlu0 %v1017
    %v1170 = vpop.xlane.xlu0 %1169
    %1171 = vmax.xlane.f32.xlu0 %v1018
    %v1172 = vpop.xlane.xlu0 %1171
    %1173 = vmax.xlane.f32.xlu0 %v1019
    %v1174 = vpop.xlane.xlu0 %1173
    %1175 = vmax.xlane.f32.xlu0 %v1020
    %v1176 = vpop.xlane.xlu0 %1175
    %1177 = vmax.xlane.f32.xlu0 %v1021
    %v1178 = vpop.xlane.xlu0 %1177
    %1179 = vmax.xlane.f32.xlu0 %v1022
    %v1180 = vpop.xlane.xlu0 %1179
    %1181 = vmax.xlane.f32.xlu0 %v1023
    %v1182 = vpop.xlane.xlu0 %1181
    %1183 = vmax.xlane.f32.xlu0 %v1024
    %v1184 = vpop.xlane.xlu0 %1183
    %v1185 = vmax.f32 %v1058, %v1122
    %v1186 = vmax.f32 %v1060, %v1124
    %v1187 = vmax.f32 %v1062, %v1126
    %v1188 = vmax.f32 %v1064, %v1128
    %v1189 = vmax.f32 %v1066, %v1130
    %v1190 = vmax.f32 %v1068, %v1132
    %v1191 = vmax.f32 %v1070, %v1134
    %v1192 = vmax.f32 %v1072, %v1136
    %v1193 = vmax.f32 %v1074, %v1138
    %v1194 = vmax.f32 %v1076, %v1140
    %v1195 = vmax.f32 %v1078, %v1142
    %v1196 = vmax.f32 %v1080, %v1144
    %v1197 = vmax.f32 %v1082, %v1146
    %v1198 = vmax.f32 %v1084, %v1148
    %v1199 = vmax.f32 %v1086, %v1150
    %v1200 = vmax.f32 %v1088, %v1152
    %v1201 = vmax.f32 %v1090, %v1154
    %v1202 = vmax.f32 %v1092, %v1156
    %v1203 = vmax.f32 %v1094, %v1158
    %v1204 = vmax.f32 %v1096, %v1160
    %v1205 = vmax.f32 %v1098, %v1162
    %v1206 = vmax.f32 %v1100, %v1164
    %v1207 = vmax.f32 %v1102, %v1166
    %v1208 = vmax.f32 %v1104, %v1168
    %v1209 = vmax.f32 %v1106, %v1170
    %v1210 = vmax.f32 %v1108, %v1172
    %v1211 = vmax.f32 %v1110, %v1174
    %v1212 = vmax.f32 %v1112, %v1176
    %v1213 = vmax.f32 %v1114, %v1178
    %v1214 = vmax.f32 %v1116, %v1180
    %v1215 = vmax.f32 %v1118, %v1182
    %v1216 = vmax.f32 %v1120, %v1184
    %v1217 = vmax.f32 %v1025, %v1185
    %v1218 = vmax.f32 %v1026, %v1186
    %v1219 = vmax.f32 %v1027, %v1187
    %v1220 = vmax.f32 %v1028, %v1188
    %v1221 = vmax.f32 %v1029, %v1189
    %v1222 = vmax.f32 %v1030, %v1190
    %v1223 = vmax.f32 %v1031, %v1191
    %v1224 = vmax.f32 %v1032, %v1192
    %v1225 = vmax.f32 %v1033, %v1193
    %v1226 = vmax.f32 %v1034, %v1194
    %v1227 = vmax.f32 %v1035, %v1195
    %v1228 = vmax.f32 %v1036, %v1196
    %v1229 = vmax.f32 %v1037, %v1197
    %v1230 = vmax.f32 %v1038, %v1198
    %v1231 = vmax.f32 %v1039, %v1199
    %v1232 = vmax.f32 %v1040, %v1200
    %v1233 = vmax.f32 %v1041, %v1201
    %v1234 = vmax.f32 %v1042, %v1202
    %v1235 = vmax.f32 %v1043, %v1203
    %v1236 = vmax.f32 %v1044, %v1204
    %v1237 = vmax.f32 %v1045, %v1205
    %v1238 = vmax.f32 %v1046, %v1206
    %v1239 = vmax.f32 %v1047, %v1207
    %v1240 = vmax.f32 %v1048, %v1208
    %v1241 = vmax.f32 %v1049, %v1209
    %v1242 = vmax.f32 %v1050, %v1210
    %v1243 = vmax.f32 %v1051, %v1211
    %v1244 = vmax.f32 %v1052, %v1212
    %v1245 = vmax.f32 %v1053, %v1213
    %v1246 = vmax.f32 %v1054, %v1214
    %v1247 = vmax.f32 %v1055, %v1215
    %v1248 = vmax.f32 %v1056, %v1216
    %v1249 = vsub.f32 %v1025, %v1217
    %v1250 = vsub.f32 %v1026, %v1218
    %v1251 = vsub.f32 %v1027, %v1219
    %v1252 = vsub.f32 %v1028, %v1220
    %v1253 = vsub.f32 %v1029, %v1221
    %v1254 = vsub.f32 %v1030, %v1222
    %v1255 = vsub.f32 %v1031, %v1223
    %v1256 = vsub.f32 %v1032, %v1224
    %v1257 = vsub.f32 %v1033, %v1225
    %v1258 = vsub.f32 %v1034, %v1226
    %v1259 = vsub.f32 %v1035, %v1227
    %v1260 = vsub.f32 %v1036, %v1228
    %v1261 = vsub.f32 %v1037, %v1229
    %v1262 = vsub.f32 %v1038, %v1230
    %v1263 = vsub.f32 %v1039, %v1231
    %v1264 = vsub.f32 %v1040, %v1232
    %v1265 = vsub.f32 %v1041, %v1233
    %v1266 = vsub.f32 %v1042, %v1234
    %v1267 = vsub.f32 %v1043, %v1235
    %v1268 = vsub.f32 %v1044, %v1236
    %v1269 = vsub.f32 %v1045, %v1237
    %v1270 = vsub.f32 %v1046, %v1238
    %v1271 = vsub.f32 %v1047, %v1239
    %v1272 = vsub.f32 %v1048, %v1240
    %v1273 = vsub.f32 %v1049, %v1241
    %v1274 = vsub.f32 %v1050, %v1242
    %v1275 = vsub.f32 %v1051, %v1243
    %v1276 = vsub.f32 %v1052, %v1244
    %v1277 = vsub.f32 %v1053, %v1245
    %v1278 = vsub.f32 %v1054, %v1246
    %v1279 = vsub.f32 %v1055, %v1247
    %v1280 = vsub.f32 %v1056, %v1248
    %v1281 = vmul.f32 %v1249, 1.442695
    %v1282 = vpow.pop %v1281
    %v1283 = vmul.f32 %v1250, 1.442695
    %v1284 = vpow.pop %v1283
    %v1285 = vmul.f32 %v1251, 1.442695
    %v1286 = vpow.pop %v1285
    %v1287 = vmul.f32 %v1252, 1.442695
    %v1288 = vpow.pop %v1287
    %v1289 = vmul.f32 %v1253, 1.442695
    %v1290 = vpow.pop %v1289
    %v1291 = vmul.f32 %v1254, 1.442695
    %v1292 = vpow.pop %v1291
    %v1293 = vmul.f32 %v1255, 1.442695
    %v1294 = vpow.pop %v1293
    %v1295 = vmul.f32 %v1256, 1.442695
    %v1296 = vpow.pop %v1295
    %v1297 = vmul.f32 %v1257, 1.442695
    %v1298 = vpow.pop %v1297
    %v1299 = vmul.f32 %v1258, 1.442695
    %v1300 = vpow.pop %v1299
    %v1301 = vmul.f32 %v1259, 1.442695
    %v1302 = vpow.pop %v1301
    %v1303 = vmul.f32 %v1260, 1.442695
    %v1304 = vpow.pop %v1303
    %v1305 = vmul.f32 %v1261, 1.442695
    %v1306 = vpow.pop %v1305
    %v1307 = vmul.f32 %v1262, 1.442695
    %v1308 = vpow.pop %v1307
    %v1309 = vmul.f32 %v1263, 1.442695
    %v1310 = vpow.pop %v1309
    %v1311 = vmul.f32 %v1264, 1.442695
    %v1312 = vpow.pop %v1311
    %v1313 = vmul.f32 %v1265, 1.442695
    %v1314 = vpow.pop %v1313
    %v1315 = vmul.f32 %v1266, 1.442695
    %v1316 = vpow.pop %v1315
    %v1317 = vmul.f32 %v1267, 1.442695
    %v1318 = vpow.pop %v1317
    %v1319 = vmul.f32 %v1268, 1.442695
    %v1320 = vpow.pop %v1319
    %v1321 = vmul.f32 %v1269, 1.442695
    %v1322 = vpow.pop %v1321
    %v1323 = vmul.f32 %v1270, 1.442695
    %v1324 = vpow.pop %v1323
    %v1325 = vmul.f32 %v1271, 1.442695
    %v1326 = vpow.pop %v1325
    %v1327 = vmul.f32 %v1272, 1.442695
    %v1328 = vpow.pop %v1327
    %v1329 = vmul.f32 %v1273, 1.442695
    %v1330 = vpow.pop %v1329
    %v1331 = vmul.f32 %v1274, 1.442695
    %v1332 = vpow.pop %v1331
    %v1333 = vmul.f32 %v1275, 1.442695
    %v1334 = vpow.pop %v1333
    %v1335 = vmul.f32 %v1276, 1.442695
    %v1336 = vpow.pop %v1335
    %v1337 = vmul.f32 %v1277, 1.442695
    %v1338 = vpow.pop %v1337
    %v1339 = vmul.f32 %v1278, 1.442695
    %v1340 = vpow.pop %v1339
    %v1341 = vmul.f32 %v1279, 1.442695
    %v1342 = vpow.pop %v1341
    %v1343 = vmul.f32 %v1280, 1.442695
    %v1344 = vpow.pop %v1343
    %v1345 = vld [vmem:[#allocation4] sm:$0xff]
    %v1346 = vld [vmem:[#allocation4 + $0x8] sm:$0xff]
    %v1347 = vld [vmem:[#allocation4 + $0x10] sm:$0xff]
    %v1348 = vld [vmem:[#allocation4 + $0x18] sm:$0xff]
    %v1349 = vld [vmem:[#allocation4 + $0x20] sm:$0xff]
    %v1350 = vld [vmem:[#allocation4 + $0x28] sm:$0xff]
    %v1351 = vld [vmem:[#allocation4 + $0x30] sm:$0xff]
    %v1352 = vld [vmem:[#allocation4 + $0x38] sm:$0xff]
    %v1353 = vld [vmem:[#allocation4 + $0x40] sm:$0xff]
    %v1354 = vld [vmem:[#allocation4 + $0x48] sm:$0xff]
    %v1355 = vld [vmem:[#allocation4 + $0x50] sm:$0xff]
    %v1356 = vld [vmem:[#allocation4 + $0x58] sm:$0xff]
    %v1357 = vld [vmem:[#allocation4 + $0x60] sm:$0xff]
    %v1358 = vld [vmem:[#allocation4 + $0x68] sm:$0xff]
    %v1359 = vld [vmem:[#allocation4 + $0x70] sm:$0xff]
    %v1360 = vld [vmem:[#allocation4 + $0x78] sm:$0xff]
    %v1361 = vld [vmem:[#allocation4 + $0x80] sm:$0xff]
    %v1362 = vld [vmem:[#allocation4 + $0x88] sm:$0xff]
    %v1363 = vld [vmem:[#allocation4 + $0x90] sm:$0xff]
    %v1364 = vld [vmem:[#allocation4 + $0x98] sm:$0xff]
    %v1365 = vld [vmem:[#allocation4 + $0xa0] sm:$0xff]
    %v1366 = vld [vmem:[#allocation4 + $0xa8] sm:$0xff]
    %v1367 = vld [vmem:[#allocation4 + $0xb0] sm:$0xff]
    %v1368 = vld [vmem:[#allocation4 + $0xb8] sm:$0xff]
    %v1369 = vld [vmem:[#allocation4 + $0xc0] sm:$0xff]
    %v1370 = vld [vmem:[#allocation4 + $0xc8] sm:$0xff]
    %v1371 = vld [vmem:[#allocation4 + $0xd0] sm:$0xff]
    %v1372 = vld [vmem:[#allocation4 + $0xd8] sm:$0xff]
    %v1373 = vld [vmem:[#allocation4 + $0xe0] sm:$0xff]
    %v1374 = vld [vmem:[#allocation4 + $0xe8] sm:$0xff]
    %v1375 = vld [vmem:[#allocation4 + $0xf0] sm:$0xff]
    %v1376 = vld [vmem:[#allocation4 + $0xf8] sm:$0xff]
    %v1377 = vmul.f32 %v1282, %v1345
    %v1378 = vmul.f32 %v1284, %v1346
    %v1379 = vmul.f32 %v1286, %v1347
    %v1380 = vmul.f32 %v1288, %v1348
    %v1381 = vmul.f32 %v1290, %v1349
    %v1382 = vmul.f32 %v1292, %v1350
    %v1383 = vmul.f32 %v1294, %v1351
    %v1384 = vmul.f32 %v1296, %v1352
    %v1385 = vmul.f32 %v1298, %v1353
    %v1386 = vmul.f32 %v1300, %v1354
    %v1387 = vmul.f32 %v1302, %v1355
    %v1388 = vmul.f32 %v1304, %v1356
    %v1389 = vmul.f32 %v1306, %v1357
    %v1390 = vmul.f32 %v1308, %v1358
    %v1391 = vmul.f32 %v1310, %v1359
    %v1392 = vmul.f32 %v1312, %v1360
    %v1393 = vmul.f32 %v1314, %v1361
    %v1394 = vmul.f32 %v1316, %v1362
    %v1395 = vmul.f32 %v1318, %v1363
    %v1396 = vmul.f32 %v1320, %v1364
    %v1397 = vmul.f32 %v1322, %v1365
    %v1398 = vmul.f32 %v1324, %v1366
    %v1399 = vmul.f32 %v1326, %v1367
    %v1400 = vmul.f32 %v1328, %v1368
    %v1401 = vmul.f32 %v1330, %v1369
    %v1402 = vmul.f32 %v1332, %v1370
    %v1403 = vmul.f32 %v1334, %v1371
    %v1404 = vmul.f32 %v1336, %v1372
    %v1405 = vmul.f32 %v1338, %v1373
    %v1406 = vmul.f32 %v1340, %v1374
    %v1407 = vmul.f32 %v1342, %v1375
    %v1408 = vmul.f32 %v1344, %v1376
    %1410 = vset.pattern.permute.xlu0 0
    %1411 = vperm.xlu0 %1410, %v1217
    %v1412 = vpop.permute.xlu0 %1411
    %1415 = vset.pattern.permute.xlu0 0
    %1416 = vperm.xlu0 %1415, %v1218
    %v1417 = vpop.permute.xlu0 %1416
    %1420 = vset.pattern.permute.xlu0 0
    %1421 = vperm.xlu0 %1420, %v1219
    %v1422 = vpop.permute.xlu0 %1421
    %1425 = vset.pattern.permute.xlu0 0
    %1426 = vperm.xlu0 %1425, %v1220
    %v1427 = vpop.permute.xlu0 %1426
    %1430 = vset.pattern.permute.xlu0 0
    %1431 = vperm.xlu0 %1430, %v1221
    %v1432 = vpop.permute.xlu0 %1431
    %1435 = vset.pattern.permute.xlu0 0
    %1436 = vperm.xlu0 %1435, %v1222
    %v1437 = vpop.permute.xlu0 %1436
    %1440 = vset.pattern.permute.xlu0 0
    %1441 = vperm.xlu0 %1440, %v1223
    %v1442 = vpop.permute.xlu0 %1441
    %1445 = vset.pattern.permute.xlu0 0
    %1446 = vperm.xlu0 %1445, %v1224
    %v1447 = vpop.permute.xlu0 %1446
    %1450 = vset.pattern.permute.xlu0 0
    %1451 = vperm.xlu0 %1450, %v1225
    %v1452 = vpop.permute.xlu0 %1451
    %1455 = vset.pattern.permute.xlu0 0
    %1456 = vperm.xlu0 %1455, %v1226
    %v1457 = vpop.permute.xlu0 %1456
    %1460 = vset.pattern.permute.xlu0 0
    %1461 = vperm.xlu0 %1460, %v1227
    %v1462 = vpop.permute.xlu0 %1461
    %1465 = vset.pattern.permute.xlu0 0
    %1466 = vperm.xlu0 %1465, %v1228
    %v1467 = vpop.permute.xlu0 %1466
    %1470 = vset.pattern.permute.xlu0 0
    %1471 = vperm.xlu0 %1470, %v1229
    %v1472 = vpop.permute.xlu0 %1471
    %1475 = vset.pattern.permute.xlu0 0
    %1476 = vperm.xlu0 %1475, %v1230
    %v1477 = vpop.permute.xlu0 %1476
    %1480 = vset.pattern.permute.xlu0 0
    %1481 = vperm.xlu0 %1480, %v1231
    %v1482 = vpop.permute.xlu0 %1481
    %1485 = vset.pattern.permute.xlu0 0
    %1486 = vperm.xlu0 %1485, %v1232
    %v1487 = vpop.permute.xlu0 %1486
    %1490 = vset.pattern.permute.xlu0 0
    %1491 = vperm.xlu0 %1490, %v1233
    %v1492 = vpop.permute.xlu0 %1491
    %1495 = vset.pattern.permute.xlu0 0
    %1496 = vperm.xlu0 %1495, %v1234
    %v1497 = vpop.permute.xlu0 %1496
    %1500 = vset.pattern.permute.xlu0 0
    %1501 = vperm.xlu0 %1500, %v1235
    %v1502 = vpop.permute.xlu0 %1501
    %1505 = vset.pattern.permute.xlu0 0
    %1506 = vperm.xlu0 %1505, %v1236
    %v1507 = vpop.permute.xlu0 %1506
    %1510 = vset.pattern.permute.xlu0 0
    %1511 = vperm.xlu0 %1510, %v1237
    %v1512 = vpop.permute.xlu0 %1511
    %1515 = vset.pattern.permute.xlu0 0
    %1516 = vperm.xlu0 %1515, %v1238
    %v1517 = vpop.permute.xlu0 %1516
    %1520 = vset.pattern.permute.xlu0 0
    %1521 = vperm.xlu0 %1520, %v1239
    %v1522 = vpop.permute.xlu0 %1521
    %1525 = vset.pattern.permute.xlu0 0
    %1526 = vperm.xlu0 %1525, %v1240
    %v1527 = vpop.permute.xlu0 %1526
    %1530 = vset.pattern.permute.xlu0 0
    %1531 = vperm.xlu0 %1530, %v1241
    %v1532 = vpop.permute.xlu0 %1531
    %1535 = vset.pattern.permute.xlu0 0
    %1536 = vperm.xlu0 %1535, %v1242
    %v1537 = vpop.permute.xlu0 %1536
    %1540 = vset.pattern.permute.xlu0 0
    %1541 = vperm.xlu0 %1540, %v1243
    %v1542 = vpop.permute.xlu0 %1541
    %1545 = vset.pattern.permute.xlu0 0
    %1546 = vperm.xlu0 %1545, %v1244
    %v1547 = vpop.permute.xlu0 %1546
    %1550 = vset.pattern.permute.xlu0 0
    %1551 = vperm.xlu0 %1550, %v1245
    %v1552 = vpop.permute.xlu0 %1551
    %1555 = vset.pattern.permute.xlu0 0
    %1556 = vperm.xlu0 %1555, %v1246
    %v1557 = vpop.permute.xlu0 %1556
    %1560 = vset.pattern.permute.xlu0 0
    %1561 = vperm.xlu0 %1560, %v1247
    %v1562 = vpop.permute.xlu0 %1561
    %1565 = vset.pattern.permute.xlu0 0
    %1566 = vperm.xlu0 %1565, %v1248
    %v1567 = vpop.permute.xlu0 %1566
    %v1569 = vsub.f32 %v720, %v1412
    %v1570 = vsub.f32 %v721, %v1417
    %v1571 = vsub.f32 %v722, %v1422
    %v1572 = vsub.f32 %v723, %v1427
    %v1573 = vsub.f32 %v724, %v1432
    %v1574 = vsub.f32 %v725, %v1437
    %v1575 = vsub.f32 %v726, %v1442
    %v1576 = vsub.f32 %v727, %v1447
    %v1577 = vsub.f32 %v728, %v1452
    %v1578 = vsub.f32 %v729, %v1457
    %v1579 = vsub.f32 %v730, %v1462
    %v1580 = vsub.f32 %v731, %v1467
    %v1581 = vsub.f32 %v732, %v1472
    %v1582 = vsub.f32 %v733, %v1477
    %v1583 = vsub.f32 %v734, %v1482
    %v1584 = vsub.f32 %v735, %v1487
    %v1585 = vsub.f32 %v736, %v1492
    %v1586 = vsub.f32 %v737, %v1497
    %v1587 = vsub.f32 %v738, %v1502
    %v1588 = vsub.f32 %v739, %v1507
    %v1589 = vsub.f32 %v740, %v1512
    %v1590 = vsub.f32 %v741, %v1517
    %v1591 = vsub.f32 %v742, %v1522
    %v1592 = vsub.f32 %v743, %v1527
    %v1593 = vsub.f32 %v744, %v1532
    %v1594 = vsub.f32 %v745, %v1537
    %v1595 = vsub.f32 %v746, %v1542
    %v1596 = vsub.f32 %v747, %v1547
    %v1597 = vsub.f32 %v748, %v1552
    %v1598 = vsub.f32 %v749, %v1557
    %v1599 = vsub.f32 %v750, %v1562
    %v1600 = vsub.f32 %v751, %v1567
    %v1601 = vmul.f32 %v1569, 1.442695
    %v1602 = vpow.pop %v1601
    %v1603 = vmul.f32 %v1570, 1.442695
    %v1604 = vpow.pop %v1603
    %v1605 = vmul.f32 %v1571, 1.442695
    %v1606 = vpow.pop %v1605
    %v1607 = vmul.f32 %v1572, 1.442695
    %v1608 = vpow.pop %v1607
    %v1609 = vmul.f32 %v1573, 1.442695
    %v1610 = vpow.pop %v1609
    %v1611 = vmul.f32 %v1574, 1.442695
    %v1612 = vpow.pop %v1611
    %v1613 = vmul.f32 %v1575, 1.442695
    %v1614 = vpow.pop %v1613
    %v1615 = vmul.f32 %v1576, 1.442695
    %v1616 = vpow.pop %v1615
    %v1617 = vmul.f32 %v1577, 1.442695
    %v1618 = vpow.pop %v1617
    %v1619 = vmul.f32 %v1578, 1.442695
    %v1620 = vpow.pop %v1619
    %v1621 = vmul.f32 %v1579, 1.442695
    %v1622 = vpow.pop %v1621
    %v1623 = vmul.f32 %v1580, 1.442695
    %v1624 = vpow.pop %v1623
    %v1625 = vmul.f32 %v1581, 1.442695
    %v1626 = vpow.pop %v1625
    %v1627 = vmul.f32 %v1582, 1.442695
    %v1628 = vpow.pop %v1627
    %v1629 = vmul.f32 %v1583, 1.442695
    %v1630 = vpow.pop %v1629
    %v1631 = vmul.f32 %v1584, 1.442695
    %v1632 = vpow.pop %v1631
    %v1633 = vmul.f32 %v1585, 1.442695
    %v1634 = vpow.pop %v1633
    %v1635 = vmul.f32 %v1586, 1.442695
    %v1636 = vpow.pop %v1635
    %v1637 = vmul.f32 %v1587, 1.442695
    %v1638 = vpow.pop %v1637
    %v1639 = vmul.f32 %v1588, 1.442695
    %v1640 = vpow.pop %v1639
    %v1641 = vmul.f32 %v1589, 1.442695
    %v1642 = vpow.pop %v1641
    %v1643 = vmul.f32 %v1590, 1.442695
    %v1644 = vpow.pop %v1643
    %v1645 = vmul.f32 %v1591, 1.442695
    %v1646 = vpow.pop %v1645
    %v1647 = vmul.f32 %v1592, 1.442695
    %v1648 = vpow.pop %v1647
    %v1649 = vmul.f32 %v1593, 1.442695
    %v1650 = vpow.pop %v1649
    %v1651 = vmul.f32 %v1594, 1.442695
    %v1652 = vpow.pop %v1651
    %v1653 = vmul.f32 %v1595, 1.442695
    %v1654 = vpow.pop %v1653
    %v1655 = vmul.f32 %v1596, 1.442695
    %v1656 = vpow.pop %v1655
    %v1657 = vmul.f32 %v1597, 1.442695
    %v1658 = vpow.pop %v1657
    %v1659 = vmul.f32 %v1598, 1.442695
    %v1660 = vpow.pop %v1659
    %v1661 = vmul.f32 %v1599, 1.442695
    %v1662 = vpow.pop %v1661
    %v1663 = vmul.f32 %v1600, 1.442695
    %v1664 = vpow.pop %v1663
    %1665 = vadd.xlane.f32.xlu0 %v1602
    %v1666 = vpop.xlane.xlu0 %1665
    %1667 = vadd.xlane.f32.xlu0 %v1604
    %v1668 = vpop.xlane.xlu0 %1667
    %1669 = vadd.xlane.f32.xlu0 %v1606
    %v1670 = vpop.xlane.xlu0 %1669
    %1671 = vadd.xlane.f32.xlu0 %v1608
    %v1672 = vpop.xlane.xlu0 %1671
    %1673 = vadd.xlane.f32.xlu0 %v1610
    %v1674 = vpop.xlane.xlu0 %1673
    %1675 = vadd.xlane.f32.xlu0 %v1612
    %v1676 = vpop.xlane.xlu0 %1675
    %1677 = vadd.xlane.f32.xlu0 %v1614
    %v1678 = vpop.xlane.xlu0 %1677
    %1679 = vadd.xlane.f32.xlu0 %v1616
    %v1680 = vpop.xlane.xlu0 %1679
    %1681 = vadd.xlane.f32.xlu0 %v1618
    %v1682 = vpop.xlane.xlu0 %1681
    %1683 = vadd.xlane.f32.xlu0 %v1620
    %v1684 = vpop.xlane.xlu0 %1683
    %1685 = vadd.xlane.f32.xlu0 %v1622
    %v1686 = vpop.xlane.xlu0 %1685
    %1687 = vadd.xlane.f32.xlu0 %v1624
    %v1688 = vpop.xlane.xlu0 %1687
    %1689 = vadd.xlane.f32.xlu0 %v1626
    %v1690 = vpop.xlane.xlu0 %1689
    %1691 = vadd.xlane.f32.xlu0 %v1628
    %v1692 = vpop.xlane.xlu0 %1691
    %1693 = vadd.xlane.f32.xlu0 %v1630
    %v1694 = vpop.xlane.xlu0 %1693
    %1695 = vadd.xlane.f32.xlu0 %v1632
    %v1696 = vpop.xlane.xlu0 %1695
    %1697 = vadd.xlane.f32.xlu0 %v1634
    %v1698 = vpop.xlane.xlu0 %1697
    %1699 = vadd.xlane.f32.xlu0 %v1636
    %v1700 = vpop.xlane.xlu0 %1699
    %1701 = vadd.xlane.f32.xlu0 %v1638
    %v1702 = vpop.xlane.xlu0 %1701
    %1703 = vadd.xlane.f32.xlu0 %v1640
    %v1704 = vpop.xlane.xlu0 %1703
    %1705 = vadd.xlane.f32.xlu0 %v1642
    %v1706 = vpop.xlane.xlu0 %1705
    %1707 = vadd.xlane.f32.xlu0 %v1644
    %v1708 = vpop.xlane.xlu0 %1707
    %1709 = vadd.xlane.f32.xlu0 %v1646
    %v1710 = vpop.xlane.xlu0 %1709
    %1711 = vadd.xlane.f32.xlu0 %v1648
    %v1712 = vpop.xlane.xlu0 %1711
    %1713 = vadd.xlane.f32.xlu0 %v1650
    %v1714 = vpop.xlane.xlu0 %1713
    %1715 = vadd.xlane.f32.xlu0 %v1652
    %v1716 = vpop.xlane.xlu0 %1715
    %1717 = vadd.xlane.f32.xlu0 %v1654
    %v1718 = vpop.xlane.xlu0 %1717
    %1719 = vadd.xlane.f32.xlu0 %v1656
    %v1720 = vpop.xlane.xlu0 %1719
    %1721 = vadd.xlane.f32.xlu0 %v1658
    %v1722 = vpop.xlane.xlu0 %1721
    %1723 = vadd.xlane.f32.xlu0 %v1660
    %v1724 = vpop.xlane.xlu0 %1723
    %1725 = vadd.xlane.f32.xlu0 %v1662
    %v1726 = vpop.xlane.xlu0 %1725
    %1727 = vadd.xlane.f32.xlu0 %v1664
    %v1728 = vpop.xlane.xlu0 %1727
    %v1729 = vadd.f32 %v1377, %v1666
    %v1730 = vadd.f32 %v1378, %v1668
    %v1731 = vadd.f32 %v1379, %v1670
    %v1732 = vadd.f32 %v1380, %v1672
    %v1733 = vadd.f32 %v1381, %v1674
    %v1734 = vadd.f32 %v1382, %v1676
    %v1735 = vadd.f32 %v1383, %v1678
    %v1736 = vadd.f32 %v1384, %v1680
    %v1737 = vadd.f32 %v1385, %v1682
    %v1738 = vadd.f32 %v1386, %v1684
    %v1739 = vadd.f32 %v1387, %v1686
    %v1740 = vadd.f32 %v1388, %v1688
    %v1741 = vadd.f32 %v1389, %v1690
    %v1742 = vadd.f32 %v1390, %v1692
    %v1743 = vadd.f32 %v1391, %v1694
    %v1744 = vadd.f32 %v1392, %v1696
    %v1745 = vadd.f32 %v1393, %v1698
    %v1746 = vadd.f32 %v1394, %v1700
    %v1747 = vadd.f32 %v1395, %v1702
    %v1748 = vadd.f32 %v1396, %v1704
    %v1749 = vadd.f32 %v1397, %v1706
    %v1750 = vadd.f32 %v1398, %v1708
    %v1751 = vadd.f32 %v1399, %v1710
    %v1752 = vadd.f32 %v1400, %v1712
    %v1753 = vadd.f32 %v1401, %v1714
    %v1754 = vadd.f32 %v1402, %v1716
    %v1755 = vadd.f32 %v1403, %v1718
    %v1756 = vadd.f32 %v1404, %v1720
    %v1757 = vadd.f32 %v1405, %v1722
    %v1758 = vadd.f32 %v1406, %v1724
    %v1759 = vadd.f32 %v1407, %v1726
    %v1760 = vadd.f32 %v1408, %v1728
    %v1761 = vsub.f32 %v993, %v1412
    %v1762 = vsub.f32 %v994, %v1417
    %v1763 = vsub.f32 %v995, %v1422
    %v1764 = vsub.f32 %v996, %v1427
    %v1765 = vsub.f32 %v997, %v1432
    %v1766 = vsub.f32 %v998, %v1437
    %v1767 = vsub.f32 %v999, %v1442
    %v1768 = vsub.f32 %v1000, %v1447
    %v1769 = vsub.f32 %v1001, %v1452
    %v1770 = vsub.f32 %v1002, %v1457
    %v1771 = vsub.f32 %v1003, %v1462
    %v1772 = vsub.f32 %v1004, %v1467
    %v1773 = vsub.f32 %v1005, %v1472
    %v1774 = vsub.f32 %v1006, %v1477
    %v1775 = vsub.f32 %v1007, %v1482
    %v1776 = vsub.f32 %v1008, %v1487
    %v1777 = vsub.f32 %v1009, %v1492
    %v1778 = vsub.f32 %v1010, %v1497
    %v1779 = vsub.f32 %v1011, %v1502
    %v1780 = vsub.f32 %v1012, %v1507
    %v1781 = vsub.f32 %v1013, %v1512
    %v1782 = vsub.f32 %v1014, %v1517
    %v1783 = vsub.f32 %v1015, %v1522
    %v1784 = vsub.f32 %v1016, %v1527
    %v1785 = vsub.f32 %v1017, %v1532
    %v1786 = vsub.f32 %v1018, %v1537
    %v1787 = vsub.f32 %v1019, %v1542
    %v1788 = vsub.f32 %v1020, %v1547
    %v1789 = vsub.f32 %v1021, %v1552
    %v1790 = vsub.f32 %v1022, %v1557
    %v1791 = vsub.f32 %v1023, %v1562
    %v1792 = vsub.f32 %v1024, %v1567
    %v1793 = vmul.f32 %v1761, 1.442695
    %v1794 = vpow.pop %v1793
    %v1795 = vmul.f32 %v1762, 1.442695
    %v1796 = vpow.pop %v1795
    %v1797 = vmul.f32 %v1763, 1.442695
    %v1798 = vpow.pop %v1797
    %v1799 = vmul.f32 %v1764, 1.442695
    %v1800 = vpow.pop %v1799
    %v1801 = vmul.f32 %v1765, 1.442695
    %v1802 = vpow.pop %v1801
    %v1803 = vmul.f32 %v1766, 1.442695
    %v1804 = vpow.pop %v1803
    %v1805 = vmul.f32 %v1767, 1.442695
    %v1806 = vpow.pop %v1805
    %v1807 = vmul.f32 %v1768, 1.442695
    %v1808 = vpow.pop %v1807
    %v1809 = vmul.f32 %v1769, 1.442695
    %v1810 = vpow.pop %v1809
    %v1811 = vmul.f32 %v1770, 1.442695
    %v1812 = vpow.pop %v1811
    %v1813 = vmul.f32 %v1771, 1.442695
    %v1814 = vpow.pop %v1813
    %v1815 = vmul.f32 %v1772, 1.442695
    %v1816 = vpow.pop %v1815
    %v1817 = vmul.f32 %v1773, 1.442695
    %v1818 = vpow.pop %v1817
    %v1819 = vmul.f32 %v1774, 1.442695
    %v1820 = vpow.pop %v1819
    %v1821 = vmul.f32 %v1775, 1.442695
    %v1822 = vpow.pop %v1821
    %v1823 = vmul.f32 %v1776, 1.442695
    %v1824 = vpow.pop %v1823
    %v1825 = vmul.f32 %v1777, 1.442695
    %v1826 = vpow.pop %v1825
    %v1827 = vmul.f32 %v1778, 1.442695
    %v1828 = vpow.pop %v1827
    %v1829 = vmul.f32 %v1779, 1.442695
    %v1830 = vpow.pop %v1829
    %v1831 = vmul.f32 %v1780, 1.442695
    %v1832 = vpow.pop %v1831
    %v1833 = vmul.f32 %v1781, 1.442695
    %v1834 = vpow.pop %v1833
    %v1835 = vmul.f32 %v1782, 1.442695
    %v1836 = vpow.pop %v1835
    %v1837 = vmul.f32 %v1783, 1.442695
    %v1838 = vpow.pop %v1837
    %v1839 = vmul.f32 %v1784, 1.442695
    %v1840 = vpow.pop %v1839
    %v1841 = vmul.f32 %v1785, 1.442695
    %v1842 = vpow.pop %v1841
    %v1843 = vmul.f32 %v1786, 1.442695
    %v1844 = vpow.pop %v1843
    %v1845 = vmul.f32 %v1787, 1.442695
    %v1846 = vpow.pop %v1845
    %v1847 = vmul.f32 %v1788, 1.442695
    %v1848 = vpow.pop %v1847
    %v1849 = vmul.f32 %v1789, 1.442695
    %v1850 = vpow.pop %v1849
    %v1851 = vmul.f32 %v1790, 1.442695
    %v1852 = vpow.pop %v1851
    %v1853 = vmul.f32 %v1791, 1.442695
    %v1854 = vpow.pop %v1853
    %v1855 = vmul.f32 %v1792, 1.442695
    %v1856 = vpow.pop %v1855
    %1857 = vadd.xlane.f32.xlu0 %v1794
    %v1858 = vpop.xlane.xlu0 %1857
    %1859 = vadd.xlane.f32.xlu0 %v1796
    %v1860 = vpop.xlane.xlu0 %1859
    %1861 = vadd.xlane.f32.xlu0 %v1798
    %v1862 = vpop.xlane.xlu0 %1861
    %1863 = vadd.xlane.f32.xlu0 %v1800
    %v1864 = vpop.xlane.xlu0 %1863
    %1865 = vadd.xlane.f32.xlu0 %v1802
    %v1866 = vpop.xlane.xlu0 %1865
    %1867 = vadd.xlane.f32.xlu0 %v1804
    %v1868 = vpop.xlane.xlu0 %1867
    %1869 = vadd.xlane.f32.xlu0 %v1806
    %v1870 = vpop.xlane.xlu0 %1869
    %1871 = vadd.xlane.f32.xlu0 %v1808
    %v1872 = vpop.xlane.xlu0 %1871
    %1873 = vadd.xlane.f32.xlu0 %v1810
    %v1874 = vpop.xlane.xlu0 %1873
    %1875 = vadd.xlane.f32.xlu0 %v1812
    %v1876 = vpop.xlane.xlu0 %1875
    %1877 = vadd.xlane.f32.xlu0 %v1814
    %v1878 = vpop.xlane.xlu0 %1877
    %1879 = vadd.xlane.f32.xlu0 %v1816
    %v1880 = vpop.xlane.xlu0 %1879
    %1881 = vadd.xlane.f32.xlu0 %v1818
    %v1882 = vpop.xlane.xlu0 %1881
    %1883 = vadd.xlane.f32.xlu0 %v1820
    %v1884 = vpop.xlane.xlu0 %1883
    %1885 = vadd.xlane.f32.xlu0 %v1822
    %v1886 = vpop.xlane.xlu0 %1885
    %1887 = vadd.xlane.f32.xlu0 %v1824
    %v1888 = vpop.xlane.xlu0 %1887
    %1889 = vadd.xlane.f32.xlu0 %v1826
    %v1890 = vpop.xlane.xlu0 %1889
    %1891 = vadd.xlane.f32.xlu0 %v1828
    %v1892 = vpop.xlane.xlu0 %1891
    %1893 = vadd.xlane.f32.xlu0 %v1830
    %v1894 = vpop.xlane.xlu0 %1893
    %1895 = vadd.xlane.f32.xlu0 %v1832
    %v1896 = vpop.xlane.xlu0 %1895
    %1897 = vadd.xlane.f32.xlu0 %v1834
    %v1898 = vpop.xlane.xlu0 %1897
    %1899 = vadd.xlane.f32.xlu0 %v1836
    %v1900 = vpop.xlane.xlu0 %1899
    %1901 = vadd.xlane.f32.xlu0 %v1838
    %v1902 = vpop.xlane.xlu0 %1901
    %1903 = vadd.xlane.f32.xlu0 %v1840
    %v1904 = vpop.xlane.xlu0 %1903
    %1905 = vadd.xlane.f32.xlu0 %v1842
    %v1906 = vpop.xlane.xlu0 %1905
    %1907 = vadd.xlane.f32.xlu0 %v1844
    %v1908 = vpop.xlane.xlu0 %1907
    %1909 = vadd.xlane.f32.xlu0 %v1846
    %v1910 = vpop.xlane.xlu0 %1909
    %1911 = vadd.xlane.f32.xlu0 %v1848
    %v1912 = vpop.xlane.xlu0 %1911
    %1913 = vadd.xlane.f32.xlu0 %v1850
    %v1914 = vpop.xlane.xlu0 %1913
    %1915 = vadd.xlane.f32.xlu0 %v1852
    %v1916 = vpop.xlane.xlu0 %1915
    %1917 = vadd.xlane.f32.xlu0 %v1854
    %v1918 = vpop.xlane.xlu0 %1917
    %1919 = vadd.xlane.f32.xlu0 %v1856
    %v1920 = vpop.xlane.xlu0 %1919
    %v1921 = vadd.f32 %v1729, %v1858
    %v1922 = vadd.f32 %v1730, %v1860
    %v1923 = vadd.f32 %v1731, %v1862
    %v1924 = vadd.f32 %v1732, %v1864
    %v1925 = vadd.f32 %v1733, %v1866
    %v1926 = vadd.f32 %v1734, %v1868
    %v1927 = vadd.f32 %v1735, %v1870
    %v1928 = vadd.f32 %v1736, %v1872
    %v1929 = vadd.f32 %v1737, %v1874
    %v1930 = vadd.f32 %v1738, %v1876
    %v1931 = vadd.f32 %v1739, %v1878
    %v1932 = vadd.f32 %v1740, %v1880
    %v1933 = vadd.f32 %v1741, %v1882
    %v1934 = vadd.f32 %v1742, %v1884
    %v1935 = vadd.f32 %v1743, %v1886
    %v1936 = vadd.f32 %v1744, %v1888
    %v1937 = vadd.f32 %v1745, %v1890
    %v1938 = vadd.f32 %v1746, %v1892
    %v1939 = vadd.f32 %v1747, %v1894
    %v1940 = vadd.f32 %v1748, %v1896
    %v1941 = vadd.f32 %v1749, %v1898
    %v1942 = vadd.f32 %v1750, %v1900
    %v1943 = vadd.f32 %v1751, %v1902
    %v1944 = vadd.f32 %v1752, %v1904
    %v1945 = vadd.f32 %v1753, %v1906
    %v1946 = vadd.f32 %v1754, %v1908
    %v1947 = vadd.f32 %v1755, %v1910
    %v1948 = vadd.f32 %v1756, %v1912
    %v1949 = vadd.f32 %v1757, %v1914
    %v1950 = vadd.f32 %v1758, %v1916
    %v1951 = vadd.f32 %v1759, %v1918
    %v1952 = vadd.f32 %v1760, %v1920
    %vm1953 = vcmask 7168
    %1954 = vst.msk [vmem:[#allocation4] sm:$0xff] %vm1953, %v1921
    %1955 = vst.msk [vmem:[#allocation4 + $0x8] sm:$0xff] %vm1953, %v1922
    %1956 = vst.msk [vmem:[#allocation4 + $0x10] sm:$0xff] %vm1953, %v1923
    %1957 = vst.msk [vmem:[#allocation4 + $0x18] sm:$0xff] %vm1953, %v1924
    %1958 = vst.msk [vmem:[#allocation4 + $0x20] sm:$0xff] %vm1953, %v1925
    %1959 = vst.msk [vmem:[#allocation4 + $0x28] sm:$0xff] %vm1953, %v1926
    %1960 = vst.msk [vmem:[#allocation4 + $0x30] sm:$0xff] %vm1953, %v1927
    %1961 = vst.msk [vmem:[#allocation4 + $0x38] sm:$0xff] %vm1953, %v1928
    %1962 = vst.msk [vmem:[#allocation4 + $0x40] sm:$0xff] %vm1953, %v1929
    %1963 = vst.msk [vmem:[#allocation4 + $0x48] sm:$0xff] %vm1953, %v1930
    %1964 = vst.msk [vmem:[#allocation4 + $0x50] sm:$0xff] %vm1953, %v1931
    %1965 = vst.msk [vmem:[#allocation4 + $0x58] sm:$0xff] %vm1953, %v1932
    %1966 = vst.msk [vmem:[#allocation4 + $0x60] sm:$0xff] %vm1953, %v1933
    %1967 = vst.msk [vmem:[#allocation4 + $0x68] sm:$0xff] %vm1953, %v1934
    %1968 = vst.msk [vmem:[#allocation4 + $0x70] sm:$0xff] %vm1953, %v1935
    %1969 = vst.msk [vmem:[#allocation4 + $0x78] sm:$0xff] %vm1953, %v1936
    %1970 = vst.msk [vmem:[#allocation4 + $0x80] sm:$0xff] %vm1953, %v1937
    %1971 = vst.msk [vmem:[#allocation4 + $0x88] sm:$0xff] %vm1953, %v1938
    %1972 = vst.msk [vmem:[#allocation4 + $0x90] sm:$0xff] %vm1953, %v1939
    %1973 = vst.msk [vmem:[#allocation4 + $0x98] sm:$0xff] %vm1953, %v1940
    %1974 = vst.msk [vmem:[#allocation4 + $0xa0] sm:$0xff] %vm1953, %v1941
    %1975 = vst.msk [vmem:[#allocation4 + $0xa8] sm:$0xff] %vm1953, %v1942
    %1976 = vst.msk [vmem:[#allocation4 + $0xb0] sm:$0xff] %vm1953, %v1943
    %1977 = vst.msk [vmem:[#allocation4 + $0xb8] sm:$0xff] %vm1953, %v1944
    %1978 = vst.msk [vmem:[#allocation4 + $0xc0] sm:$0xff] %vm1953, %v1945
    %1979 = vst.msk [vmem:[#allocation4 + $0xc8] sm:$0xff] %vm1953, %v1946
    %1980 = vst.msk [vmem:[#allocation4 + $0xd0] sm:$0xff] %vm1953, %v1947
    %1981 = vst.msk [vmem:[#allocation4 + $0xd8] sm:$0xff] %vm1953, %v1948
    %1982 = vst.msk [vmem:[#allocation4 + $0xe0] sm:$0xff] %vm1953, %v1949
    %1983 = vst.msk [vmem:[#allocation4 + $0xe8] sm:$0xff] %vm1953, %v1950
    %1984 = vst.msk [vmem:[#allocation4 + $0xf0] sm:$0xff] %vm1953, %v1951
    %1985 = vst.msk [vmem:[#allocation4 + $0xf8] sm:$0xff] %vm1953, %v1952
    %1986 = vst.msk [vmem:[#allocation3] sm:$0xff] %vm1953, %v1217
    %1987 = vst.msk [vmem:[#allocation3 + $0x8] sm:$0xff] %vm1953, %v1218
    %1988 = vst.msk [vmem:[#allocation3 + $0x10] sm:$0xff] %vm1953, %v1219
    %1989 = vst.msk [vmem:[#allocation3 + $0x18] sm:$0xff] %vm1953, %v1220
    %1990 = vst.msk [vmem:[#allocation3 + $0x20] sm:$0xff] %vm1953, %v1221
    %1991 = vst.msk [vmem:[#allocation3 + $0x28] sm:$0xff] %vm1953, %v1222
    %1992 = vst.msk [vmem:[#allocation3 + $0x30] sm:$0xff] %vm1953, %v1223
    %1993 = vst.msk [vmem:[#allocation3 + $0x38] sm:$0xff] %vm1953, %v1224
    %1994 = vst.msk [vmem:[#allocation3 + $0x40] sm:$0xff] %vm1953, %v1225
    %1995 = vst.msk [vmem:[#allocation3 + $0x48] sm:$0xff] %vm1953, %v1226
    %1996 = vst.msk [vmem:[#allocation3 + $0x50] sm:$0xff] %vm1953, %v1227
    %1997 = vst.msk [vmem:[#allocation3 + $0x58] sm:$0xff] %vm1953, %v1228
    %1998 = vst.msk [vmem:[#allocation3 + $0x60] sm:$0xff] %vm1953, %v1229
    %1999 = vst.msk [vmem:[#allocation3 + $0x68] sm:$0xff] %vm1953, %v1230
    %2000 = vst.msk [vmem:[#allocation3 + $0x70] sm:$0xff] %vm1953, %v1231
    %2001 = vst.msk [vmem:[#allocation3 + $0x78] sm:$0xff] %vm1953, %v1232
    %2002 = vst.msk [vmem:[#allocation3 + $0x80] sm:$0xff] %vm1953, %v1233
    %2003 = vst.msk [vmem:[#allocation3 + $0x88] sm:$0xff] %vm1953, %v1234
    %2004 = vst.msk [vmem:[#allocation3 + $0x90] sm:$0xff] %vm1953, %v1235
    %2005 = vst.msk [vmem:[#allocation3 + $0x98] sm:$0xff] %vm1953, %v1236
    %2006 = vst.msk [vmem:[#allocation3 + $0xa0] sm:$0xff] %vm1953, %v1237
    %2007 = vst.msk [vmem:[#allocation3 + $0xa8] sm:$0xff] %vm1953, %v1238
    %2008 = vst.msk [vmem:[#allocation3 + $0xb0] sm:$0xff] %vm1953, %v1239
    %2009 = vst.msk [vmem:[#allocation3 + $0xb8] sm:$0xff] %vm1953, %v1240
    %2010 = vst.msk [vmem:[#allocation3 + $0xc0] sm:$0xff] %vm1953, %v1241
    %2011 = vst.msk [vmem:[#allocation3 + $0xc8] sm:$0xff] %vm1953, %v1242
    %2012 = vst.msk [vmem:[#allocation3 + $0xd0] sm:$0xff] %vm1953, %v1243
    %2013 = vst.msk [vmem:[#allocation3 + $0xd8] sm:$0xff] %vm1953, %v1244
    %2014 = vst.msk [vmem:[#allocation3 + $0xe0] sm:$0xff] %vm1953, %v1245
    %2015 = vst.msk [vmem:[#allocation3 + $0xe8] sm:$0xff] %vm1953, %v1246
    %2016 = vst.msk [vmem:[#allocation3 + $0xf0] sm:$0xff] %vm1953, %v1247
    %2017 = vst.msk [vmem:[#allocation3 + $0xf8] sm:$0xff] %vm1953, %v1248
    // Predicated region
    $region38: #{tpu_custom_call.1} parent=1 // pred_check
      %p2018 = pneg %p81
    $region39: #{tpu_custom_call.1} parent=1 // pred_check_branch
      %2020 = sbr.rel (%p2018) target = $region41
    $region40: #{tpu_custom_call.1} parent=1 // pred_region
      %v2021 = vld [vmem:[#allocation3] sm:$0xff]
      %v2022 = vld [vmem:[#allocation3 + $0x8] sm:$0xff]
      %v2023 = vld [vmem:[#allocation3 + $0x10] sm:$0xff]
      %v2024 = vld [vmem:[#allocation3 + $0x18] sm:$0xff]
      %v2025 = vld [vmem:[#allocation3 + $0x20] sm:$0xff]
      %v2026 = vld [vmem:[#allocation3 + $0x28] sm:$0xff]
      %v2027 = vld [vmem:[#allocation3 + $0x30] sm:$0xff]
      %v2028 = vld [vmem:[#allocation3 + $0x38] sm:$0xff]
      %v2029 = vld [vmem:[#allocation3 + $0x40] sm:$0xff]
      %v2030 = vld [vmem:[#allocation3 + $0x48] sm:$0xff]
      %v2031 = vld [vmem:[#allocation3 + $0x50] sm:$0xff]
      %v2032 = vld [vmem:[#allocation3 + $0x58] sm:$0xff]
      %v2033 = vld [vmem:[#allocation3 + $0x60] sm:$0xff]
      %v2034 = vld [vmem:[#allocation3 + $0x68] sm:$0xff]
      %v2035 = vld [vmem:[#allocation3 + $0x70] sm:$0xff]
      %v2036 = vld [vmem:[#allocation3 + $0x78] sm:$0xff]
      %v2037 = vld [vmem:[#allocation3 + $0x80] sm:$0xff]
      %v2038 = vld [vmem:[#allocation3 + $0x88] sm:$0xff]
      %v2039 = vld [vmem:[#allocation3 + $0x90] sm:$0xff]
      %v2040 = vld [vmem:[#allocation3 + $0x98] sm:$0xff]
      %v2041 = vld [vmem:[#allocation3 + $0xa0] sm:$0xff]
      %v2042 = vld [vmem:[#allocation3 + $0xa8] sm:$0xff]
      %v2043 = vld [vmem:[#allocation3 + $0xb0] sm:$0xff]
      %v2044 = vld [vmem:[#allocation3 + $0xb8] sm:$0xff]
      %v2045 = vld [vmem:[#allocation3 + $0xc0] sm:$0xff]
      %v2046 = vld [vmem:[#allocation3 + $0xc8] sm:$0xff]
      %v2047 = vld [vmem:[#allocation3 + $0xd0] sm:$0xff]
      %v2048 = vld [vmem:[#allocation3 + $0xd8] sm:$0xff]
      %v2049 = vld [vmem:[#allocation3 + $0xe0] sm:$0xff]
      %v2050 = vld [vmem:[#allocation3 + $0xe8] sm:$0xff]
      %v2051 = vld [vmem:[#allocation3 + $0xf0] sm:$0xff]
      %v2052 = vld [vmem:[#allocation3 + $0xf8] sm:$0xff]
      %v2053 = vld [vmem:[#allocation4] sm:$0xff]
      %v2054 = vld [vmem:[#allocation4 + $0x8] sm:$0xff]
      %v2055 = vld [vmem:[#allocation4 + $0x10] sm:$0xff]
      %v2056 = vld [vmem:[#allocation4 + $0x18] sm:$0xff]
      %v2057 = vld [vmem:[#allocation4 + $0x20] sm:$0xff]
      %v2058 = vld [vmem:[#allocation4 + $0x28] sm:$0xff]
      %v2059 = vld [vmem:[#allocation4 + $0x30] sm:$0xff]
      %v2060 = vld [vmem:[#allocation4 + $0x38] sm:$0xff]
      %v2061 = vld [vmem:[#allocation4 + $0x40] sm:$0xff]
      %v2062 = vld [vmem:[#allocation4 + $0x48] sm:$0xff]
      %v2063 = vld [vmem:[#allocation4 + $0x50] sm:$0xff]
      %v2064 = vld [vmem:[#allocation4 + $0x58] sm:$0xff]
      %v2065 = vld [vmem:[#allocation4 + $0x60] sm:$0xff]
      %v2066 = vld [vmem:[#allocation4 + $0x68] sm:$0xff]
      %v2067 = vld [vmem:[#allocation4 + $0x70] sm:$0xff]
      %v2068 = vld [vmem:[#allocation4 + $0x78] sm:$0xff]
      %v2069 = vld [vmem:[#allocation4 + $0x80] sm:$0xff]
      %v2070 = vld [vmem:[#allocation4 + $0x88] sm:$0xff]
      %v2071 = vld [vmem:[#allocation4 + $0x90] sm:$0xff]
      %v2072 = vld [vmem:[#allocation4 + $0x98] sm:$0xff]
      %v2073 = vld [vmem:[#allocation4 + $0xa0] sm:$0xff]
      %v2074 = vld [vmem:[#allocation4 + $0xa8] sm:$0xff]
      %v2075 = vld [vmem:[#allocation4 + $0xb0] sm:$0xff]
      %v2076 = vld [vmem:[#allocation4 + $0xb8] sm:$0xff]
      %v2077 = vld [vmem:[#allocation4 + $0xc0] sm:$0xff]
      %v2078 = vld [vmem:[#allocation4 + $0xc8] sm:$0xff]
      %v2079 = vld [vmem:[#allocation4 + $0xd0] sm:$0xff]
      %v2080 = vld [vmem:[#allocation4 + $0xd8] sm:$0xff]
      %v2081 = vld [vmem:[#allocation4 + $0xe0] sm:$0xff]
      %v2082 = vld [vmem:[#allocation4 + $0xe8] sm:$0xff]
      %v2083 = vld [vmem:[#allocation4 + $0xf0] sm:$0xff]
      %v2084 = vld [vmem:[#allocation4 + $0xf8] sm:$0xff]
      %v2085 = vlog2.pop %v2053
      %v2086 = vmul.f32 %v2085, 0.6931472
      %v2087 = vlog2.pop %v2054
      %v2088 = vmul.f32 %v2087, 0.6931472
      %v2089 = vlog2.pop %v2055
      %v2090 = vmul.f32 %v2089, 0.6931472
      %v2091 = vlog2.pop %v2056
      %v2092 = vmul.f32 %v2091, 0.6931472
      %v2093 = vlog2.pop %v2057
      %v2094 = vmul.f32 %v2093, 0.6931472
      %v2095 = vlog2.pop %v2058
      %v2096 = vmul.f32 %v2095, 0.6931472
      %v2097 = vlog2.pop %v2059
      %v2098 = vmul.f32 %v2097, 0.6931472
      %v2099 = vlog2.pop %v2060
      %v2100 = vmul.f32 %v2099, 0.6931472
      %v2101 = vlog2.pop %v2061
      %v2102 = vmul.f32 %v2101, 0.6931472
      %v2103 = vlog2.pop %v2062
      %v2104 = vmul.f32 %v2103, 0.6931472
      %v2105 = vlog2.pop %v2063
      %v2106 = vmul.f32 %v2105, 0.6931472
      %v2107 = vlog2.pop %v2064
      %v2108 = vmul.f32 %v2107, 0.6931472
      %v2109 = vlog2.pop %v2065
      %v2110 = vmul.f32 %v2109, 0.6931472
      %v2111 = vlog2.pop %v2066
      %v2112 = vmul.f32 %v2111, 0.6931472
      %v2113 = vlog2.pop %v2067
      %v2114 = vmul.f32 %v2113, 0.6931472
      %v2115 = vlog2.pop %v2068
      %v2116 = vmul.f32 %v2115, 0.6931472
      %v2117 = vlog2.pop %v2069
      %v2118 = vmul.f32 %v2117, 0.6931472
      %v2119 = vlog2.pop %v2070
      %v2120 = vmul.f32 %v2119, 0.6931472
      %v2121 = vlog2.pop %v2071
      %v2122 = vmul.f32 %v2121, 0.6931472
      %v2123 = vlog2.pop %v2072
      %v2124 = vmul.f32 %v2123, 0.6931472
      %v2125 = vlog2.pop %v2073
      %v2126 = vmul.f32 %v2125, 0.6931472
      %v2127 = vlog2.pop %v2074
      %v2128 = vmul.f32 %v2127, 0.6931472
      %v2129 = vlog2.pop %v2075
      %v2130 = vmul.f32 %v2129, 0.6931472
      %v2131 = vlog2.pop %v2076
      %v2132 = vmul.f32 %v2131, 0.6931472
      %v2133 = vlog2.pop %v2077
      %v2134 = vmul.f32 %v2133, 0.6931472
      %v2135 = vlog2.pop %v2078
      %v2136 = vmul.f32 %v2135, 0.6931472
      %v2137 = vlog2.pop %v2079
      %v2138 = vmul.f32 %v2137, 0.6931472
      %v2139 = vlog2.pop %v2080
      %v2140 = vmul.f32 %v2139, 0.6931472
      %v2141 = vlog2.pop %v2081
      %v2142 = vmul.f32 %v2141, 0.6931472
      %v2143 = vlog2.pop %v2082
      %v2144 = vmul.f32 %v2143, 0.6931472
      %v2145 = vlog2.pop %v2083
      %v2146 = vmul.f32 %v2145, 0.6931472
      %v2147 = vlog2.pop %v2084
      %v2148 = vmul.f32 %v2147, 0.6931472
      %v2149 = vadd.f32 %v2021, %v2086
      %v2150 = vadd.f32 %v2022, %v2088
      %v2151 = vadd.f32 %v2023, %v2090
      %v2152 = vadd.f32 %v2024, %v2092
      %v2153 = vadd.f32 %v2025, %v2094
      %v2154 = vadd.f32 %v2026, %v2096
      %v2155 = vadd.f32 %v2027, %v2098
      %v2156 = vadd.f32 %v2028, %v2100
      %v2157 = vadd.f32 %v2029, %v2102
      %v2158 = vadd.f32 %v2030, %v2104
      %v2159 = vadd.f32 %v2031, %v2106
      %v2160 = vadd.f32 %v2032, %v2108
      %v2161 = vadd.f32 %v2033, %v2110
      %v2162 = vadd.f32 %v2034, %v2112
      %v2163 = vadd.f32 %v2035, %v2114
      %v2164 = vadd.f32 %v2036, %v2116
      %v2165 = vadd.f32 %v2037, %v2118
      %v2166 = vadd.f32 %v2038, %v2120
      %v2167 = vadd.f32 %v2039, %v2122
      %v2168 = vadd.f32 %v2040, %v2124
      %v2169 = vadd.f32 %v2041, %v2126
      %v2170 = vadd.f32 %v2042, %v2128
      %v2171 = vadd.f32 %v2043, %v2130
      %v2172 = vadd.f32 %v2044, %v2132
      %v2173 = vadd.f32 %v2045, %v2134
      %v2174 = vadd.f32 %v2046, %v2136
      %v2175 = vadd.f32 %v2047, %v2138
      %v2176 = vadd.f32 %v2048, %v2140
      %v2177 = vadd.f32 %v2049, %v2142
      %v2178 = vadd.f32 %v2050, %v2144
      %v2179 = vadd.f32 %v2051, %v2146
      %v2180 = vadd.f32 %v2052, %v2148
      %v2181 = vld [vmem:[#allocation2] sm:$0xff]
      %v2182 = vld [vmem:[#allocation2 + $0x8] sm:$0xff]
      %v2183 = vld [vmem:[#allocation2 + $0x10] sm:$0xff]
      %v2184 = vld [vmem:[#allocation2 + $0x18] sm:$0xff]
      %v2185 = vld [vmem:[#allocation2 + $0x20] sm:$0xff]
      %v2186 = vld [vmem:[#allocation2 + $0x28] sm:$0xff]
      %v2187 = vld [vmem:[#allocation2 + $0x30] sm:$0xff]
      %v2188 = vld [vmem:[#allocation2 + $0x38] sm:$0xff]
      %v2189 = vld [vmem:[#allocation2 + $0x40] sm:$0xff]
      %v2190 = vld [vmem:[#allocation2 + $0x48] sm:$0xff]
      %v2191 = vld [vmem:[#allocation2 + $0x50] sm:$0xff]
      %v2192 = vld [vmem:[#allocation2 + $0x58] sm:$0xff]
      %v2193 = vld [vmem:[#allocation2 + $0x60] sm:$0xff]
      %v2194 = vld [vmem:[#allocation2 + $0x68] sm:$0xff]
      %v2195 = vld [vmem:[#allocation2 + $0x70] sm:$0xff]
      %v2196 = vld [vmem:[#allocation2 + $0x78] sm:$0xff]
      %v2197 = vld [vmem:[#allocation8] sm:$0xff]
      %v2198 = vld [vmem:[#allocation8 + $0x8] sm:$0xff]
      %v2199 = vld [vmem:[#allocation8 + $0x10] sm:$0xff]
      %v2200 = vld [vmem:[#allocation8 + $0x18] sm:$0xff]
      %v2201 = vld [vmem:[#allocation8 + $0x20] sm:$0xff]
      %v2202 = vld [vmem:[#allocation8 + $0x28] sm:$0xff]
      %v2203 = vld [vmem:[#allocation8 + $0x30] sm:$0xff]
      %v2204 = vld [vmem:[#allocation8 + $0x38] sm:$0xff]
      %v2205 = vld [vmem:[#allocation8 + $0x40] sm:$0xff]
      %v2206 = vld [vmem:[#allocation8 + $0x48] sm:$0xff]
      %v2207 = vld [vmem:[#allocation8 + $0x50] sm:$0xff]
      %v2208 = vld [vmem:[#allocation8 + $0x58] sm:$0xff]
      %v2209 = vld [vmem:[#allocation8 + $0x60] sm:$0xff]
      %v2210 = vld [vmem:[#allocation8 + $0x68] sm:$0xff]
      %v2211 = vld [vmem:[#allocation8 + $0x70] sm:$0xff]
      %v2212 = vld [vmem:[#allocation8 + $0x78] sm:$0xff]
      %v2213 = vmul.f32 %v2181, %v2197
      %v2214 = vmul.f32 %v2182, %v2198
      %v2215 = vmul.f32 %v2183, %v2199
      %v2216 = vmul.f32 %v2184, %v2200
      %v2217 = vmul.f32 %v2185, %v2201
      %v2218 = vmul.f32 %v2186, %v2202
      %v2219 = vmul.f32 %v2187, %v2203
      %v2220 = vmul.f32 %v2188, %v2204
      %v2221 = vmul.f32 %v2189, %v2205
      %v2222 = vmul.f32 %v2190, %v2206
      %v2223 = vmul.f32 %v2191, %v2207
      %v2224 = vmul.f32 %v2192, %v2208
      %v2225 = vmul.f32 %v2193, %v2209
      %v2226 = vmul.f32 %v2194, %v2210
      %v2227 = vmul.f32 %v2195, %v2211
      %v2228 = vmul.f32 %v2196, %v2212
      %2229 = vadd.xlane.f32.xlu0 %v2213
      %v2230 = vpop.xlane.xlu0 %2229
      %2231 = vadd.xlane.f32.xlu0 %v2214
      %v2232 = vpop.xlane.xlu0 %2231
      %2233 = vadd.xlane.f32.xlu0 %v2215
      %v2234 = vpop.xlane.xlu0 %2233
      %2235 = vadd.xlane.f32.xlu0 %v2216
      %v2236 = vpop.xlane.xlu0 %2235
      %2237 = vadd.xlane.f32.xlu0 %v2217
      %v2238 = vpop.xlane.xlu0 %2237
      %2239 = vadd.xlane.f32.xlu0 %v2218
      %v2240 = vpop.xlane.xlu0 %2239
      %2241 = vadd.xlane.f32.xlu0 %v2219
      %v2242 = vpop.xlane.xlu0 %2241
      %2243 = vadd.xlane.f32.xlu0 %v2220
      %v2244 = vpop.xlane.xlu0 %2243
      %2245 = vadd.xlane.f32.xlu0 %v2221
      %v2246 = vpop.xlane.xlu0 %2245
      %2247 = vadd.xlane.f32.xlu0 %v2222
      %v2248 = vpop.xlane.xlu0 %2247
      %2249 = vadd.xlane.f32.xlu0 %v2223
      %v2250 = vpop.xlane.xlu0 %2249
      %2251 = vadd.xlane.f32.xlu0 %v2224
      %v2252 = vpop.xlane.xlu0 %2251
      %2253 = vadd.xlane.f32.xlu0 %v2225
      %v2254 = vpop.xlane.xlu0 %2253
      %2255 = vadd.xlane.f32.xlu0 %v2226
      %v2256 = vpop.xlane.xlu0 %2255
      %2257 = vadd.xlane.f32.xlu0 %v2227
      %v2258 = vpop.xlane.xlu0 %2257
      %2259 = vadd.xlane.f32.xlu0 %v2228
      %v2260 = vpop.xlane.xlu0 %2259
      %vm2261 = vcmp.lt.s32.totalorder %v447, 8
      %vm2262 = vcmp.lt.s32.totalorder %v448, 8
      %vm2263 = vcmp.lt.s32.totalorder %v449, 8
      %vm2264 = vcmp.lt.s32.totalorder %v450, 8
      %vm2265 = vcmp.lt.s32.totalorder %v451, 8
      %vm2266 = vcmp.lt.s32.totalorder %v452, 8
      %vm2267 = vcmp.lt.s32.totalorder %v453, 8
      %vm2268 = vcmp.lt.s32.totalorder %v454, 8
      %vm2269 = vcmp.lt.s32.totalorder %v455, 8
      %vm2270 = vcmp.lt.s32.totalorder %v456, 8
      %vm2271 = vcmp.lt.s32.totalorder %v457, 8
      %vm2272 = vcmp.lt.s32.totalorder %v458, 8
      %vm2273 = vcmp.lt.s32.totalorder %v459, 8
      %vm2274 = vcmp.lt.s32.totalorder %v460, 8
      %vm2275 = vcmp.lt.s32.totalorder %v461, 8
      %vm2276 = vcmp.lt.s32.totalorder %v462, 8
      %vm2277 = vcmp.lt.s32.totalorder %v463, 8
      %vm2278 = vcmp.lt.s32.totalorder %v464, 8
      %vm2279 = vcmp.lt.s32.totalorder %v465, 8
      %vm2280 = vcmp.lt.s32.totalorder %v466, 8
      %vm2281 = vcmp.lt.s32.totalorder %v467, 8
      %vm2282 = vcmp.lt.s32.totalorder %v468, 8
      %vm2283 = vcmp.lt.s32.totalorder %v469, 8
      %vm2284 = vcmp.lt.s32.totalorder %v470, 8
      %vm2285 = vcmp.lt.s32.totalorder %v471, 8
      %vm2286 = vcmp.lt.s32.totalorder %v472, 8
      %vm2287 = vcmp.lt.s32.totalorder %v473, 8
      %vm2288 = vcmp.lt.s32.totalorder %v474, 8
      %vm2289 = vcmp.lt.s32.totalorder %v475, 8
      %vm2290 = vcmp.lt.s32.totalorder %v476, 8
      %vm2291 = vcmp.lt.s32.totalorder %v477, 8
      %vm2292 = vcmp.lt.s32.totalorder %v478, 8
      %v2293 = vsub.f32 %v2149, %v2230
      %v2294 = vsub.f32 %v2150, %v2232
      %v2295 = vsub.f32 %v2151, %v2234
      %v2296 = vsub.f32 %v2152, %v2236
      %v2297 = vsub.f32 %v2153, %v2238
      %v2298 = vsub.f32 %v2154, %v2240
      %v2299 = vsub.f32 %v2155, %v2242
      %v2300 = vsub.f32 %v2156, %v2244
      %v2301 = vsub.f32 %v2157, %v2246
      %v2302 = vsub.f32 %v2158, %v2248
      %v2303 = vsub.f32 %v2159, %v2250
      %v2304 = vsub.f32 %v2160, %v2252
      %v2305 = vsub.f32 %v2161, %v2254
      %v2306 = vsub.f32 %v2162, %v2256
      %v2307 = vsub.f32 %v2163, %v2258
      %v2308 = vsub.f32 %v2164, %v2260
      %v2309 = vsub.f32 %v2165, %v2230
      %v2310 = vsub.f32 %v2166, %v2232
      %v2311 = vsub.f32 %v2167, %v2234
      %v2312 = vsub.f32 %v2168, %v2236
      %v2313 = vsub.f32 %v2169, %v2238
      %v2314 = vsub.f32 %v2170, %v2240
      %v2315 = vsub.f32 %v2171, %v2242
      %v2316 = vsub.f32 %v2172, %v2244
      %v2317 = vsub.f32 %v2173, %v2246
      %v2318 = vsub.f32 %v2174, %v2248
      %v2319 = vsub.f32 %v2175, %v2250
      %v2320 = vsub.f32 %v2176, %v2252
      %v2321 = vsub.f32 %v2177, %v2254
      %v2322 = vsub.f32 %v2178, %v2256
      %v2323 = vsub.f32 %v2179, %v2258
      %v2324 = vsub.f32 %v2180, %v2260
      %v2325 = vsel %vm2261, %v2293, 0.0
      %v2326 = vsel %vm2262, %v2294, 0.0
      %v2327 = vsel %vm2263, %v2295, 0.0
      %v2328 = vsel %vm2264, %v2296, 0.0
      %v2329 = vsel %vm2265, %v2297, 0.0
      %v2330 = vsel %vm2266, %v2298, 0.0
      %v2331 = vsel %vm2267, %v2299, 0.0
      %v2332 = vsel %vm2268, %v2300, 0.0
      %v2333 = vsel %vm2269, %v2301, 0.0
      %v2334 = vsel %vm2270, %v2302, 0.0
      %v2335 = vsel %vm2271, %v2303, 0.0
      %v2336 = vsel %vm2272, %v2304, 0.0
      %v2337 = vsel %vm2273, %v2305, 0.0
      %v2338 = vsel %vm2274, %v2306, 0.0
      %v2339 = vsel %vm2275, %v2307, 0.0
      %v2340 = vsel %vm2276, %v2308, 0.0
      %v2341 = vsel %vm2277, %v2309, 0.0
      %v2342 = vsel %vm2278, %v2310, 0.0
      %v2343 = vsel %vm2279, %v2311, 0.0
      %v2344 = vsel %vm2280, %v2312, 0.0
      %v2345 = vsel %vm2281, %v2313, 0.0
      %v2346 = vsel %vm2282, %v2314, 0.0
      %v2347 = vsel %vm2283, %v2315, 0.0
      %v2348 = vsel %vm2284, %v2316, 0.0
      %v2349 = vsel %vm2285, %v2317, 0.0
      %v2350 = vsel %vm2286, %v2318, 0.0
      %v2351 = vsel %vm2287, %v2319, 0.0
      %v2352 = vsel %vm2288, %v2320, 0.0
      %v2353 = vsel %vm2289, %v2321, 0.0
      %v2354 = vsel %vm2290, %v2322, 0.0
      %v2355 = vsel %vm2291, %v2323, 0.0
      %v2356 = vsel %vm2292, %v2324, 0.0
      %v2357 = vsel %vm1953, %v2325, 0.0
      %v2358 = vsel %vm1953, %v2326, 0.0
      %v2359 = vadd.f32 %v2357, %v2358
      %v2360 = vsel %vm1953, %v2327, 0.0
      %v2361 = vadd.f32 %v2359, %v2360
      %v2362 = vsel %vm1953, %v2328, 0.0
      %v2363 = vadd.f32 %v2361, %v2362
      %v2364 = vsel %vm1953, %v2329, 0.0
      %v2365 = vadd.f32 %v2363, %v2364
      %v2366 = vsel %vm1953, %v2330, 0.0
      %v2367 = vadd.f32 %v2365, %v2366
      %v2368 = vsel %vm1953, %v2331, 0.0
      %v2369 = vadd.f32 %v2367, %v2368
      %v2370 = vsel %vm1953, %v2332, 0.0
      %v2371 = vadd.f32 %v2369, %v2370
      %v2372 = vsel %vm1953, %v2333, 0.0
      %v2373 = vadd.f32 %v2371, %v2372
      %v2374 = vsel %vm1953, %v2334, 0.0
      %v2375 = vadd.f32 %v2373, %v2374
      %v2376 = vsel %vm1953, %v2335, 0.0
      %v2377 = vadd.f32 %v2375, %v2376
      %v2378 = vsel %vm1953, %v2336, 0.0
      %v2379 = vadd.f32 %v2377, %v2378
      %v2380 = vsel %vm1953, %v2337, 0.0
      %v2381 = vadd.f32 %v2379, %v2380
      %v2382 = vsel %vm1953, %v2338, 0.0
      %v2383 = vadd.f32 %v2381, %v2382
      %v2384 = vsel %vm1953, %v2339, 0.0
      %v2385 = vadd.f32 %v2383, %v2384
      %v2386 = vsel %vm1953, %v2340, 0.0
      %v2387 = vadd.f32 %v2385, %v2386
      %v2388 = vsel %vm1953, %v2341, 0.0
      %v2389 = vadd.f32 %v2387, %v2388
      %v2390 = vsel %vm1953, %v2342, 0.0
      %v2391 = vadd.f32 %v2389, %v2390
      %v2392 = vsel %vm1953, %v2343, 0.0
      %v2393 = vadd.f32 %v2391, %v2392
      %v2394 = vsel %vm1953, %v2344, 0.0
      %v2395 = vadd.f32 %v2393, %v2394
      %v2396 = vsel %vm1953, %v2345, 0.0
      %v2397 = vadd.f32 %v2395, %v2396
      %v2398 = vsel %vm1953, %v2346, 0.0
      %v2399 = vadd.f32 %v2397, %v2398
      %v2400 = vsel %vm1953, %v2347, 0.0
      %v2401 = vadd.f32 %v2399, %v2400
      %v2402 = vsel %vm1953, %v2348, 0.0
      %v2403 = vadd.f32 %v2401, %v2402
      %v2404 = vsel %vm1953, %v2349, 0.0
      %v2405 = vadd.f32 %v2403, %v2404
      %v2406 = vsel %vm1953, %v2350, 0.0
      %v2407 = vadd.f32 %v2405, %v2406
      %v2408 = vsel %vm1953, %v2351, 0.0
      %v2409 = vadd.f32 %v2407, %v2408
      %v2410 = vsel %vm1953, %v2352, 0.0
      %v2411 = vadd.f32 %v2409, %v2410
      %v2412 = vsel %vm1953, %v2353, 0.0
      %v2413 = vadd.f32 %v2411, %v2412
      %v2414 = vsel %vm1953, %v2354, 0.0
      %v2415 = vadd.f32 %v2413, %v2414
      %v2416 = vsel %vm1953, %v2355, 0.0
      %v2417 = vadd.f32 %v2415, %v2416
      %v2418 = vsel %vm1953, %v2356, 0.0
      %v2419 = vadd.f32 %v2417, %v2418
      %2420 = vadd.xlane.f32.xlu0 %v2419
      %v2421 = vpop.xlane.xlu0 %2420
      %v2422 = vrot.slane %v2421, 4
      %v2423 = vadd.f32 %v2421, %v2422
      %v2424 = vrot.slane %v2423, 2
      %v2425 = vadd.f32 %v2423, %v2424
      %v2426 = vrot.slane %v2425, 1
      %v2427 = vadd.f32 %v2425, %v2426
      %s2428 = vtos %v2427
      %v2429 = vstv %s2428
      %2430 = vst [vmem:[#allocation13] sm:$0xff] %v2429
    $region41: #{tpu_custom_call.1} parent=1 // pred_fallthru
      _
    // Predicated region
    $region42: #{tpu_custom_call.1} parent=1 // pred_check
      _
    $region43: #{tpu_custom_call.1} parent=1 // pred_check_branch
      %2432 = sbr.rel (0) target = $region45
    $region44: #{tpu_custom_call.1} parent=1 // pred_region
      %2434 = vsyncadd [#allocation7], 0
      %s2436 = sshll.u32 [#allocation13], 4
      %s2437 = int_to_ptr.vmem [resolvable:$true] %s2436
      %s2438 = sshll.u32 %s4, 4
      %s2439 = int_to_ptr.hbm [resolvable:$true] %s2438
      %2441 = dma.vmem_to_hbm [thread:$0]  %s2437, 128, %s2439, [#allocation7]
    $region45: #{tpu_custom_call.1} parent=1 // pred_fallthru
      _
    // Predicated region
    $region46: #{tpu_custom_call.1} parent=1 // pred_check
      _
    $region47: #{tpu_custom_call.1} parent=1 // pred_check_branch
      %2443 = sbr.rel (0) target = $region49
    $region48: #{tpu_custom_call.1} parent=1 // pred_region
      %2445 = dma.done [#allocation7], 128
    $region49: #{tpu_custom_call.1} parent=1 // pred_fallthru
      _
    %2446 = vsyncpa [#allocation6], 1
    %2447 = vsyncpa [#allocation9], 1
    %2448 = vsyncpa [#allocation12], 1
    %2449 = vsyncpa [#allocation7], 1

</llo_original>
